<compile_context>
chip_gen: v5e
topology: v5e:2x2
jax: 0.10.0
libtpu: 0.0.40
codegen_flags: <defaults>
</compile_context>

<pallas_src>
import functools

import jax
import jax.numpy as jnp
from jax.experimental import pallas as pl
from jax.experimental.pallas import tpu as pltpu


def _round_up(x, m):
    return ((x + m - 1) // m) * m


def _const_spec(block_shape, index_map):
    """BlockSpec for operands whose block index never changes.

    Double-buffering such operands just doubles their VMEM residency for zero
    overlap benefit, so request a single buffer when the API supports it.
    """
    try:
        return pl.BlockSpec(block_shape, index_map, pipeline_mode=pl.Buffered(1))
    except Exception:
        return pl.BlockSpec(block_shape, index_map)


def _tpu_config():
    """Generation-aware (vmem_limit_bytes, q_tile, kv_tile, exp_dtype)."""
    vmem_cap = None
    try:
        vmem_cap = int(pltpu.get_tpu_info().vmem_capacity_bytes)
    except Exception:
        vmem_cap = None
    try:
        kind = jax.devices()[0].device_kind.lower()
    except Exception:
        kind = ""
    if vmem_cap is None:
        # Fall back to device_kind: v5/v6 class parts have 128 MiB VMEM,
        # assume the conservative 64 MiB (v7x-class) otherwise.
        vmem_cap = 128 * 2**20 if any(t in kind for t in ("v5", "v6")) else 64 * 2**20
    # bf16 EUP exists on v6e+ only; keep f32 exp elsewhere (correct everywhere,
    # the dtype choice is purely a throughput knob).
    new_gen = any(t in kind for t in ("v6", "v7", "trillium"))
    exp_dtype = jnp.bfloat16 if new_gen else jnp.float32
    if vmem_cap >= 100 * 2**20:          # v5e / v6e: 128 MiB physical VMEM
        return 96 * 2**20, 256, 256, exp_dtype
    return 48 * 2**20, 128, 256, exp_dtype  # v7x-class: 64 MiB physical VMEM


# ---------------------------------------------------------------------------
# Kernel 1: fused Q/K/V projection, writing (B, H, S, d) layout directly.
# ---------------------------------------------------------------------------
def _qkv_proj_kernel(xq_ref, xk_ref, xv_ref, w_ref, b_ref,
                     q_ref, k_ref, v_ref, *, num_heads, d_head):
    # xq/xk/xv: (Ts, E) f32 | w_ref: (3, E, E) bf16 | b_ref: (3, 1, E) f32
    # q/k/v out: (H, Ts, d) bf16
    def proj(x_ref, idx, o_ref):
        x = x_ref[...].astype(jnp.bfloat16)
        y = jnp.dot(x, w_ref[idx], preferred_element_type=jnp.float32) + b_ref[idx]
        y = y.astype(o_ref.dtype)                       # (Ts, E) bf16
        # Head split via static lane slices -> the (B,H,S,d) layout is produced
        # here, so no XLA transpose passes over QKV in HBM.
        for h in range(num_heads):
            o_ref[h] = y[:, h * d_head:(h + 1) * d_head]

    proj(xq_ref, 0, q_ref)
    proj(xk_ref, 1, k_ref)
    proj(xv_ref, 2, v_ref)


# ---------------------------------------------------------------------------
# Kernel 2: flash-style attention (head-batched) + fused output projection.
# ---------------------------------------------------------------------------
def _attn_kernel(q_ref, k_ref, v_ref, bias_ref, wo_ref, bo_ref, o_ref,
                 m_sc, l_sc, acc_sc, *, exp_dtype):
    kv = pl.program_id(2)

    @pl.when(kv == 0)
    def _():
        m_sc[...] = jnp.full_like(m_sc, -jnp.inf)
        l_sc[...] = jnp.zeros_like(l_sc)
        acc_sc[...] = jnp.zeros_like(acc_sc)

    q = q_ref[...]                       # (H, Tq, d) bf16, pre-scaled by 1/sqrt(d)
    k = k_ref[...]                       # (H, Tk, d) bf16
    v = v_ref[...]                       # (H, Tk, d) bf16

    # One head-batched MXU contraction (bf16 operands, f32 accumulation).
    s = jnp.einsum("hqd,hkd->hqk", q, k,
                   preferred_element_type=jnp.float32)            # (H, Tq, Tk) f32
    # Additive key-mask bias: whole (Nk, Tk) table is resident per batch; pick
    # the current kv row with a dynamic first-axis index (no per-step tiny DMA).
    s = s + bias_ref[kv][None, None, :]

    # Online softmax; statistics stay in f32 on every generation.
    m_prev = m_sc[...]
    m_new = jnp.maximum(m_prev, jnp.max(s, axis=-1, keepdims=True))
    alpha = jnp.exp(m_prev - m_new)
    p = jnp.exp((s - m_new).astype(exp_dtype))         # bf16 exp on v6e+/v7x, f32 on v5e
    l_sc[...] = alpha * l_sc[...] + jnp.sum(p.astype(jnp.float32),
                                            axis=-1, keepdims=True)
    acc_sc[...] = alpha * acc_sc[...] + jnp.einsum(
        "hqk,hkd->hqd", p.astype(v.dtype), v,
        preferred_element_type=jnp.float32)                        # (H, Tq, d)
    m_sc[...] = m_new

    @pl.when(kv == pl.num_programs(2) - 1)
    def _():
        inv_l = pl.reciprocal(l_sc[...], approx=True)              # EUP, off the VALU
        ctx = (acc_sc[...] * inv_l).astype(jnp.bfloat16)           # (H, Tq, d)
        # Fused output projection accumulated head-by-head:
        #   out = b_o + sum_h ctx[h] @ W_o[h]
        # so only a single (Tq, E) f32 slab is ever live (no (H, Tq, E) temp).
        out = bo_ref[...]                                          # (1, E) f32
        for h in range(ctx.shape[0]):
            out = out + jnp.dot(ctx[h], wo_ref[h],
                                preferred_element_type=jnp.float32)
        o_ref[...] = out.astype(o_ref.dtype)


def multihead_attention(queries, keys, values, params, mask=None, *, num_heads):
    """Pallas forward for torch MultiheadAttention (eval mode).

    queries/keys/values: (B, S, E).  params = (wq, bq, wk, bk, wv, bv, wo, bo)
    with weights stored (in, out) so y = x @ W + b (W == torch_weight.T).
    mask: (B, 1, 1, S) / (B, S) / None; 1 = attend, 0 = masked.
    """
    B, S, E = queries.shape
    H = num_heads
    assert E % H == 0
    d = E // H

    wq, bq, wk, bk, wv, bv, wo, bo = params
    scale = 1.0 / jnp.sqrt(jnp.float32(d))

    vmem_limit, tq_pref, tk_pref, exp_dtype = _tpu_config()

    # Pad S up to a tile multiple (128-multiple tiles), never a full-S fallback.
    S128 = _round_up(S, 128)
    tq = min(tq_pref, S128)
    tk = min(tk_pref, S128)
    t_big = max(tq, tk)
    S_pad = _round_up(S, t_big)
    ts = t_big                      # kernel-1 sequence tile; divides S_pad

    def pad_seq(x):
        return x if S_pad == S else jnp.pad(x, ((0, 0), (0, S_pad - S), (0, 0)))

    xq, xk, xv = pad_seq(queries), pad_seq(keys), pad_seq(values)

    # Weights with y = x @ W + b; 1/sqrt(d) folded into the Q projection so the
    # attention kernel never rescales.
    w_stack = jnp.stack([wq * scale, wk, wv]).astype(jnp.bfloat16)       # (3, E, E)
    b_stack = jnp.stack([bq * scale, bk, bv]).reshape(3, 1, E).astype(jnp.float32)

    # --- Kernel 1: fused QKV projection, (B, H, S_pad, d) outputs -----------
    # TODO(synk): for very large E the (E, E) weight blocks should be K-tiled
    # (reduction grid axis + f32 accumulator scratch) to bound VMEM on v7x.
    qkv_shape = jax.ShapeDtypeStruct((B, H, S_pad, d), jnp.bfloat16)
    qh, kh, vh = pl.pallas_call(
        functools.partial(_qkv_proj_kernel, num_heads=H, d_head=d),
        out_shape=(qkv_shape, qkv_shape, qkv_shape),
        grid=(B, S_pad // ts),
        in_specs=[
            pl.BlockSpec((None, ts, E), lambda b, s: (b, s, 0)),
            pl.BlockSpec((None, ts, E), lambda b, s: (b, s, 0)),
            pl.BlockSpec((None, ts, E), lambda b, s: (b, s, 0)),
            _const_spec((3, E, E), lambda b, s: (0, 0, 0)),
            _const_spec((3, 1, E), lambda b, s: (0, 0, 0)),
        ],
        out_specs=(
            pl.BlockSpec((None, H, ts, d), lambda b, s: (b, 0, s, 0)),
            pl.BlockSpec((None, H, ts, d), lambda b, s: (b, 0, s, 0)),
            pl.BlockSpec((None, H, ts, d), lambda b, s: (b, 0, s, 0)),
        ),
        compiler_params=pltpu.CompilerParams(
            dimension_semantics=("parallel", "parallel"),
            vmem_limit_bytes=vmem_limit),
    )(xq, xk, xv, w_stack, b_stack)

    # Additive key-mask bias (1 = keep -> 0, 0 = masked -> -1e9).  Padded key
    # positions get a strictly lower bias so they vanish even in the
    # "all real keys masked" corner case.
    if mask is None:
        keep = jnp.ones((B, S), jnp.float32)
    else:
        keep = mask.reshape(B, S).astype(jnp.float32)
    bias = (keep - 1.0) * 1e9
    if S_pad > S:
        bias = jnp.pad(bias, ((0, 0), (0, S_pad - S)), constant_values=-2e9)
    bias3 = bias.reshape(B, S_pad // tk, tk)

    wo_h = wo.reshape(H, d, E).astype(jnp.bfloat16)      # (H, d, E), pure view
    bo_r = bo.reshape(1, E).astype(jnp.float32)

    # --- Kernel 2: flash attention + fused output projection ----------------
    # TODO(synk): for very large E, tile W_o over its output (E) axis on v7x.
    # TODO(synk): d_head as the minor dim of Q/K/V blocks may pad lanes to 128;
    #   if profiling shows vld underfill, pack two heads per 128-lane block.
    out = pl.pallas_call(
        functools.partial(_attn_kernel, exp_dtype=exp_dtype),
        out_shape=jax.ShapeDtypeStruct((B, S_pad, E), queries.dtype),
        grid=(B, S_pad // tq, S_pad // tk),
        in_specs=[
            pl.BlockSpec((None, H, tq, d), lambda b, qi, ki: (b, 0, qi, 0)),
            pl.BlockSpec((None, H, tk, d), lambda b, qi, ki: (b, 0, ki, 0)),
            pl.BlockSpec((None, H, tk, d), lambda b, qi, ki: (b, 0, ki, 0)),
            pl.BlockSpec((None, S_pad // tk, tk), lambda b, qi, ki: (b, 0, 0)),
            _const_spec((H, d, E), lambda b, qi, ki: (0, 0, 0)),
            _const_spec((1, E), lambda b, qi, ki: (0, 0)),
        ],
        out_specs=pl.BlockSpec((None, tq, E), lambda b, qi, ki: (b, qi, 0)),
        scratch_shapes=[
            pltpu.VMEM((H, tq, 1), jnp.float32),        # running max m
            pltpu.VMEM((H, tq, 1), jnp.float32),        # running denom l
            pltpu.VMEM((H, tq, d), jnp.float32),        # running context acc
        ],
        compiler_params=pltpu.CompilerParams(
            dimension_semantics=("parallel", "parallel", "arbitrary"),
            vmem_limit_bytes=vmem_limit),
    )(qh, kh, vh, bias3, wo_h, bo_r)

    # TODO(synk): dropout omitted (inference-mode identity; p has no effect at eval).
    return out[:, :S, :] if S_pad > S else out


# ---------------------------------------------------------------------------
# Pure-JAX f32 reference reproducing the torch forward (eval mode).
# ---------------------------------------------------------------------------
def reference_mha(queries, keys, values, params, mask2d, num_heads):
    B, S, E = queries.shape
    d_head = E // num_heads
    wq, bq, wk, bk, wv, bv, wo, bo = params

    def split(x):  # (B, S, E) -> (B, H, S, d)
        return x.reshape(B, S, num_heads, d_head).transpose(0, 2, 1, 3)

    Q = split(queries @ wq + bq)
    K = split(keys @ wk + bk)
    V = split(values @ wv + bv)

    scores = jnp.einsum("bhqd,bhkd->bhqk", Q, K) / jnp.sqrt(jnp.float32(d_head))
    if mask2d is not None:
        scores = jnp.where(mask2d[:, None, None, :] == 0.0, -1e9, scores)
    attn = jax.nn.softmax(scores, axis=-1)
    ctx = jnp.einsum("bhqk,bhkd->bhqd", attn, V)
    ctx = ctx.transpose(0, 2, 1, 3).reshape(B, S, E)
    return ctx @ wo + bo


if __name__ == "__main__":
    B, S, E, H = 2, 8, 32, 4

    key = jax.random.PRNGKey(0)
    ks = jax.random.split(key, 12)

    def init_linear(kw, kb, fan_in):
        bound = 1.0 / jnp.sqrt(jnp.float32(fan_in))
        w = jax.random.uniform(kw, (E, E), jnp.float32, -bound, bound)
        b = jax.random.uniform(kb, (E,), jnp.float32, -bound, bound)
        return w, b

    wq, bq = init_linear(ks[0], ks[1], E)
    wk, bk = init_linear(ks[2], ks[3], E)
    wv, bv = init_linear(ks[4], ks[5], E)
    wo, bo = init_linear(ks[6], ks[7], E)
    params = (wq, bq, wk, bk, wv, bv, wo, bo)

    queries = jax.random.normal(ks[8], (B, S, E), jnp.float32)
    keys_in = jax.random.normal(ks[9], (B, S, E), jnp.float32)
    values_in = jax.random.normal(ks[10], (B, S, E), jnp.float32)
    # mask: 1 = attend, 0 = masked (torch shape (B,1,1,S)); mask a few key positions
    mask = jnp.ones((B, 1, 1, S), jnp.float32).at[:, :, :, -2:].set(0.0)

    out = multihead_attention(queries, keys_in, values_in, params, mask, num_heads=H)
    out = jax.block_until_ready(out)

    ref = reference_mha(queries, keys_in, values_in, params,
                        mask.reshape(B, S), num_heads=H)

    assert out.shape == (B, S, E)
    # bf16 MXU operands / bf16 softmax probabilities (f32 stats & accumulation)
    # => compare at bf16-level tolerance.
    max_diff = jnp.max(jnp.abs(out - ref))
    assert jnp.allclose(out, ref, atol=7.5e-2, rtol=7.5e-2), f"max abs diff {max_diff}"

    print("KERNEL_OK")
</pallas_src>

<mosaic_0001>
module attributes {stable_mosaic.version = 11 : i64} {
  func.func @_qkv_proj_kernel(%arg0: i32, %arg1: i32, %arg2: memref<1x128x32xf32, #tpu.memory_space<vmem>>, %arg3: memref<1x128x32xf32, #tpu.memory_space<vmem>>, %arg4: memref<1x128x32xf32, #tpu.memory_space<vmem>>, %arg5: memref<3x32x32xbf16, #tpu.memory_space<vmem>>, %arg6: memref<3x1x32xf32, #tpu.memory_space<vmem>>, %arg7: memref<1x4x128x8xbf16, #tpu.memory_space<vmem>>, %arg8: memref<1x4x128x8xbf16, #tpu.memory_space<vmem>>, %arg9: memref<1x4x128x8xbf16, #tpu.memory_space<vmem>>) attributes {dimension_semantics = [#tpu.dimension_semantics<parallel>, #tpu.dimension_semantics<parallel>], iteration_bounds = array<i64: 2, 1>, scalar_prefetch = 0 : i64, scratch_operands = 0 : i64, tpu.core_type = #tpu.core_type<tc>, window_params = [{transform_indices = @transform_0, window_bounds = array<i64: 1, 128, 32>}, {transform_indices = @transform_1, window_bounds = array<i64: 1, 128, 32>}, {transform_indices = @transform_2, window_bounds = array<i64: 1, 128, 32>}, {pipeline_mode = #tpu.pipeline_mode<synchronous>, transform_indices = @transform_3, window_bounds = array<i64: 3, 32, 32>}, {pipeline_mode = #tpu.pipeline_mode<synchronous>, transform_indices = @transform_4, window_bounds = array<i64: 3, 1, 32>}, {transform_indices = @transform_5, window_bounds = array<i64: 1, 4, 128, 8>}, {transform_indices = @transform_6, window_bounds = array<i64: 1, 4, 128, 8>}, {transform_indices = @transform_7, window_bounds = array<i64: 1, 4, 128, 8>}]} {
    %c0 = arith.constant 0 : index
    %c0_0 = arith.constant 0 : index
    %c0_1 = arith.constant 0 : index
    %0 = vector.load %arg2[%c0, %c0_0, %c0_1] : memref<1x128x32xf32, #tpu.memory_space<vmem>>, vector<1x128x32xf32>
    %1 = vector.shape_cast %0 : vector<1x128x32xf32> to vector<128x32xf32>
    %2 = arith.truncf %1 : vector<128x32xf32> to vector<128x32xbf16>
    %c0_2 = arith.constant 0 : index
    %c0_3 = arith.constant 0 : index
    %c0_4 = arith.constant 0 : index
    %3 = vector.load %arg5[%c0_2, %c0_3, %c0_4] : memref<3x32x32xbf16, #tpu.memory_space<vmem>>, vector<1x32x32xbf16>
    %4 = vector.shape_cast %3 : vector<1x32x32xbf16> to vector<32x32xbf16>
    %cst = arith.constant dense<0.000000e+00> : vector<128x32xf32>
    %5 = tpu.matmul %2, %4, %cst {dimension_numbers = #tpu.dot_dimension_numbers<[1], [0], [0], [1], [0, 0, 1, 1], [], []>} : vector<128x32xbf16>, vector<32x32xbf16>, vector<128x32xf32> -> vector<128x32xf32>
    %c0_5 = arith.constant 0 : index
    %c0_6 = arith.constant 0 : index
    %c0_7 = arith.constant 0 : index
    %6 = vector.load %arg6[%c0_5, %c0_6, %c0_7] : memref<3x1x32xf32, #tpu.memory_space<vmem>>, vector<1x1x32xf32>
    %7 = vector.shape_cast %6 : vector<1x1x32xf32> to vector<1x32xf32>
    %8 = vector.broadcast %7 : vector<1x32xf32> to vector<128x32xf32>
    %9 = arith.addf %5, %8 : vector<128x32xf32>
    %10 = arith.truncf %9 : vector<128x32xf32> to vector<128x32xbf16>
    %11 = vector.extract_strided_slice %10 {offsets = [0, 0], sizes = [128, 8], strides = [1, 1]} : vector<128x32xbf16> to vector<128x8xbf16>
    %c0_8 = arith.constant 0 : index
    %c0_9 = arith.constant 0 : index
    %c0_10 = arith.constant 0 : index
    %c0_11 = arith.constant 0 : index
    %12 = vector.load %arg7[%c0_8, %c0_9, %c0_10, %c0_11] : memref<1x4x128x8xbf16, #tpu.memory_space<vmem>>, vector<1x1x128x8xbf16>
    %13 = vector.shape_cast %12 : vector<1x1x128x8xbf16> to vector<128x8xbf16>
    %14 = vector.shape_cast %11 : vector<128x8xbf16> to vector<1x1x128x8xbf16>
    tpu.vector_store %arg7[%c0_8, %c0_9, %c0_10, %c0_11], %14 {strides = array<i32>} : memref<1x4x128x8xbf16, #tpu.memory_space<vmem>>, vector<1x1x128x8xbf16>,
    %15 = vector.extract_strided_slice %10 {offsets = [0, 8], sizes = [128, 8], strides = [1, 1]} : vector<128x32xbf16> to vector<128x8xbf16>
    %c0_12 = arith.constant 0 : index
    %c1 = arith.constant 1 : index
    %c0_13 = arith.constant 0 : index
    %c0_14 = arith.constant 0 : index
    %16 = vector.load %arg7[%c0_12, %c1, %c0_13, %c0_14] : memref<1x4x128x8xbf16, #tpu.memory_space<vmem>>, vector<1x1x128x8xbf16>
    %17 = vector.shape_cast %16 : vector<1x1x128x8xbf16> to vector<128x8xbf16>
    %18 = vector.shape_cast %15 : vector<128x8xbf16> to vector<1x1x128x8xbf16>
    tpu.vector_store %arg7[%c0_12, %c1, %c0_13, %c0_14], %18 {strides = array<i32>} : memref<1x4x128x8xbf16, #tpu.memory_space<vmem>>, vector<1x1x128x8xbf16>,
    %19 = vector.extract_strided_slice %10 {offsets = [0, 16], sizes = [128, 8], strides = [1, 1]} : vector<128x32xbf16> to vector<128x8xbf16>
    %c0_15 = arith.constant 0 : index
    %c2 = arith.constant 2 : index
    %c0_16 = arith.constant 0 : index
    %c0_17 = arith.constant 0 : index
    %20 = vector.load %arg7[%c0_15, %c2, %c0_16, %c0_17] : memref<1x4x128x8xbf16, #tpu.memory_space<vmem>>, vector<1x1x128x8xbf16>
    %21 = vector.shape_cast %20 : vector<1x1x128x8xbf16> to vector<128x8xbf16>
    %22 = vector.shape_cast %19 : vector<128x8xbf16> to vector<1x1x128x8xbf16>
    tpu.vector_store %arg7[%c0_15, %c2, %c0_16, %c0_17], %22 {strides = array<i32>} : memref<1x4x128x8xbf16, #tpu.memory_space<vmem>>, vector<1x1x128x8xbf16>,
    %23 = vector.extract_strided_slice %10 {offsets = [0, 24], sizes = [128, 8], strides = [1, 1]} : vector<128x32xbf16> to vector<128x8xbf16>
    %c0_18 = arith.constant 0 : index
    %c3 = arith.constant 3 : index
    %c0_19 = arith.constant 0 : index
    %c0_20 = arith.constant 0 : index
    %24 = vector.load %arg7[%c0_18, %c3, %c0_19, %c0_20] : memref<1x4x128x8xbf16, #tpu.memory_space<vmem>>, vector<1x1x128x8xbf16>
    %25 = vector.shape_cast %24 : vector<1x1x128x8xbf16> to vector<128x8xbf16>
    %26 = vector.shape_cast %23 : vector<128x8xbf16> to vector<1x1x128x8xbf16>
    tpu.vector_store %arg7[%c0_18, %c3, %c0_19, %c0_20], %26 {strides = array<i32>} : memref<1x4x128x8xbf16, #tpu.memory_space<vmem>>, vector<1x1x128x8xbf16>,
    %c0_21 = arith.constant 0 : index
    %c0_22 = arith.constant 0 : index
    %c0_23 = arith.constant 0 : index
    %27 = vector.load %arg3[%c0_21, %c0_22, %c0_23] : memref<1x128x32xf32, #tpu.memory_space<vmem>>, vector<1x128x32xf32>
    %28 = vector.shape_cast %27 : vector<1x128x32xf32> to vector<128x32xf32>
    %29 = arith.truncf %28 : vector<128x32xf32> to vector<128x32xbf16>
    %c1_24 = arith.constant 1 : index
    %c0_25 = arith.constant 0 : index
    %c0_26 = arith.constant 0 : index
    %30 = vector.load %arg5[%c1_24, %c0_25, %c0_26] : memref<3x32x32xbf16, #tpu.memory_space<vmem>>, vector<1x32x32xbf16>
    %31 = vector.shape_cast %30 : vector<1x32x32xbf16> to vector<32x32xbf16>
    %cst_27 = arith.constant dense<0.000000e+00> : vector<128x32xf32>
    %32 = tpu.matmul %29, %31, %cst_27 {dimension_numbers = #tpu.dot_dimension_numbers<[1], [0], [0], [1], [0, 0, 1, 1], [], []>} : vector<128x32xbf16>, vector<32x32xbf16>, vector<128x32xf32> -> vector<128x32xf32>
    %c1_28 = arith.constant 1 : index
    %c0_29 = arith.constant 0 : index
    %c0_30 = arith.constant 0 : index
    %33 = vector.load %arg6[%c1_28, %c0_29, %c0_30] : memref<3x1x32xf32, #tpu.memory_space<vmem>>, vector<1x1x32xf32>
    %34 = vector.shape_cast %33 : vector<1x1x32xf32> to vector<1x32xf32>
    %35 = vector.broadcast %34 : vector<1x32xf32> to vector<128x32xf32>
    %36 = arith.addf %32, %35 : vector<128x32xf32>
    %37 = arith.truncf %36 : vector<128x32xf32> to vector<128x32xbf16>
    %38 = vector.extract_strided_slice %37 {offsets = [0, 0], sizes = [128, 8], strides = [1, 1]} : vector<128x32xbf16> to vector<128x8xbf16>
    %c0_31 = arith.constant 0 : index
    %c0_32 = arith.constant 0 : index
    %c0_33 = arith.constant 0 : index
    %c0_34 = arith.constant 0 : index
    %39 = vector.load %arg8[%c0_31, %c0_32, %c0_33, %c0_34] : memref<1x4x128x8xbf16, #tpu.memory_space<vmem>>, vector<1x1x128x8xbf16>
    %40 = vector.shape_cast %39 : vector<1x1x128x8xbf16> to vector<128x8xbf16>
    %41 = vector.shape_cast %38 : vector<128x8xbf16> to vector<1x1x128x8xbf16>
    tpu.vector_store %arg8[%c0_31, %c0_32, %c0_33, %c0_34], %41 {strides = array<i32>} : memref<1x4x128x8xbf16, #tpu.memory_space<vmem>>, vector<1x1x128x8xbf16>,
    %42 = vector.extract_strided_slice %37 {offsets = [0, 8], sizes = [128, 8], strides = [1, 1]} : vector<128x32xbf16> to vector<128x8xbf16>
    %c0_35 = arith.constant 0 : index
    %c1_36 = arith.constant 1 : index
    %c0_37 = arith.constant 0 : index
    %c0_38 = arith.constant 0 : index
    %43 = vector.load %arg8[%c0_35, %c1_36, %c0_37, %c0_38] : memref<1x4x128x8xbf16, #tpu.memory_space<vmem>>, vector<1x1x128x8xbf16>
    %44 = vector.shape_cast %43 : vector<1x1x128x8xbf16> to vector<128x8xbf16>
    %45 = vector.shape_cast %42 : vector<128x8xbf16> to vector<1x1x128x8xbf16>
    tpu.vector_store %arg8[%c0_35, %c1_36, %c0_37, %c0_38], %45 {strides = array<i32>} : memref<1x4x128x8xbf16, #tpu.memory_space<vmem>>, vector<1x1x128x8xbf16>,
    %46 = vector.extract_strided_slice %37 {offsets = [0, 16], sizes = [128, 8], strides = [1, 1]} : vector<128x32xbf16> to vector<128x8xbf16>
    %c0_39 = arith.constant 0 : index
    %c2_40 = arith.constant 2 : index
    %c0_41 = arith.constant 0 : index
    %c0_42 = arith.constant 0 : index
    %47 = vector.load %arg8[%c0_39, %c2_40, %c0_41, %c0_42] : memref<1x4x128x8xbf16, #tpu.memory_space<vmem>>, vector<1x1x128x8xbf16>
    %48 = vector.shape_cast %47 : vector<1x1x128x8xbf16> to vector<128x8xbf16>
    %49 = vector.shape_cast %46 : vector<128x8xbf16> to vector<1x1x128x8xbf16>
    tpu.vector_store %arg8[%c0_39, %c2_40, %c0_41, %c0_42], %49 {strides = array<i32>} : memref<1x4x128x8xbf16, #tpu.memory_space<vmem>>, vector<1x1x128x8xbf16>,
    %50 = vector.extract_strided_slice %37 {offsets = [0, 24], sizes = [128, 8], strides = [1, 1]} : vector<128x32xbf16> to vector<128x8xbf16>
    %c0_43 = arith.constant 0 : index
    %c3_44 = arith.constant 3 : index
    %c0_45 = arith.constant 0 : index
    %c0_46 = arith.constant 0 : index
    %51 = vector.load %arg8[%c0_43, %c3_44, %c0_45, %c0_46] : memref<1x4x128x8xbf16, #tpu.memory_space<vmem>>, vector<1x1x128x8xbf16>
    %52 = vector.shape_cast %51 : vector<1x1x128x8xbf16> to vector<128x8xbf16>
    %53 = vector.shape_cast %50 : vector<128x8xbf16> to vector<1x1x128x8xbf16>
    tpu.vector_store %arg8[%c0_43, %c3_44, %c0_45, %c0_46], %53 {strides = array<i32>} : memref<1x4x128x8xbf16, #tpu.memory_space<vmem>>, vector<1x1x128x8xbf16>,
    %c0_47 = arith.constant 0 : index
    %c0_48 = arith.constant 0 : index
    %c0_49 = arith.constant 0 : index
    %54 = vector.load %arg4[%c0_47, %c0_48, %c0_49] : memref<1x128x32xf32, #tpu.memory_space<vmem>>, vector<1x128x32xf32>
    %55 = vector.shape_cast %54 : vector<1x128x32xf32> to vector<128x32xf32>
    %56 = arith.truncf %55 : vector<128x32xf32> to vector<128x32xbf16>
    %c2_50 = arith.constant 2 : index
    %c0_51 = arith.constant 0 : index
    %c0_52 = arith.constant 0 : index
    %57 = vector.load %arg5[%c2_50, %c0_51, %c0_52] : memref<3x32x32xbf16, #tpu.memory_space<vmem>>, vector<1x32x32xbf16>
    %58 = vector.shape_cast %57 : vector<1x32x32xbf16> to vector<32x32xbf16>
    %cst_53 = arith.constant dense<0.000000e+00> : vector<128x32xf32>
    %59 = tpu.matmul %56, %58, %cst_53 {dimension_numbers = #tpu.dot_dimension_numbers<[1], [0], [0], [1], [0, 0, 1, 1], [], []>} : vector<128x32xbf16>, vector<32x32xbf16>, vector<128x32xf32> -> vector<128x32xf32>
    %c2_54 = arith.constant 2 : index
    %c0_55 = arith.constant 0 : index
    %c0_56 = arith.constant 0 : index
    %60 = vector.load %arg6[%c2_54, %c0_55, %c0_56] : memref<3x1x32xf32, #tpu.memory_space<vmem>>, vector<1x1x32xf32>
    %61 = vector.shape_cast %60 : vector<1x1x32xf32> to vector<1x32xf32>
    %62 = vector.broadcast %61 : vector<1x32xf32> to vector<128x32xf32>
    %63 = arith.addf %59, %62 : vector<128x32xf32>
    %64 = arith.truncf %63 : vector<128x32xf32> to vector<128x32xbf16>
    %65 = vector.extract_strided_slice %64 {offsets = [0, 0], sizes = [128, 8], strides = [1, 1]} : vector<128x32xbf16> to vector<128x8xbf16>
    %c0_57 = arith.constant 0 : index
    %c0_58 = arith.constant 0 : index
    %c0_59 = arith.constant 0 : index
    %c0_60 = arith.constant 0 : index
    %66 = vector.load %arg9[%c0_57, %c0_58, %c0_59, %c0_60] : memref<1x4x128x8xbf16, #tpu.memory_space<vmem>>, vector<1x1x128x8xbf16>
    %67 = vector.shape_cast %66 : vector<1x1x128x8xbf16> to vector<128x8xbf16>
    %68 = vector.shape_cast %65 : vector<128x8xbf16> to vector<1x1x128x8xbf16>
    tpu.vector_store %arg9[%c0_57, %c0_58, %c0_59, %c0_60], %68 {strides = array<i32>} : memref<1x4x128x8xbf16, #tpu.memory_space<vmem>>, vector<1x1x128x8xbf16>,
    %69 = vector.extract_strided_slice %64 {offsets = [0, 8], sizes = [128, 8], strides = [1, 1]} : vector<128x32xbf16> to vector<128x8xbf16>
    %c0_61 = arith.constant 0 : index
    %c1_62 = arith.constant 1 : index
    %c0_63 = arith.constant 0 : index
    %c0_64 = arith.constant 0 : index
    %70 = vector.load %arg9[%c0_61, %c1_62, %c0_63, %c0_64] : memref<1x4x128x8xbf16, #tpu.memory_space<vmem>>, vector<1x1x128x8xbf16>
    %71 = vector.shape_cast %70 : vector<1x1x128x8xbf16> to vector<128x8xbf16>
    %72 = vector.shape_cast %69 : vector<128x8xbf16> to vector<1x1x128x8xbf16>
    tpu.vector_store %arg9[%c0_61, %c1_62, %c0_63, %c0_64], %72 {strides = array<i32>} : memref<1x4x128x8xbf16, #tpu.memory_space<vmem>>, vector<1x1x128x8xbf16>,
    %73 = vector.extract_strided_slice %64 {offsets = [0, 16], sizes = [128, 8], strides = [1, 1]} : vector<128x32xbf16> to vector<128x8xbf16>
    %c0_65 = arith.constant 0 : index
    %c2_66 = arith.constant 2 : index
    %c0_67 = arith.constant 0 : index
    %c0_68 = arith.constant 0 : index
    %74 = vector.load %arg9[%c0_65, %c2_66, %c0_67, %c0_68] : memref<1x4x128x8xbf16, #tpu.memory_space<vmem>>, vector<1x1x128x8xbf16>
    %75 = vector.shape_cast %74 : vector<1x1x128x8xbf16> to vector<128x8xbf16>
    %76 = vector.shape_cast %73 : vector<128x8xbf16> to vector<1x1x128x8xbf16>
    tpu.vector_store %arg9[%c0_65, %c2_66, %c0_67, %c0_68], %76 {strides = array<i32>} : memref<1x4x128x8xbf16, #tpu.memory_space<vmem>>, vector<1x1x128x8xbf16>,
    %77 = vector.extract_strided_slice %64 {offsets = [0, 24], sizes = [128, 8], strides = [1, 1]} : vector<128x32xbf16> to vector<128x8xbf16>
    %c0_69 = arith.constant 0 : index
    %c3_70 = arith.constant 3 : index
    %c0_71 = arith.constant 0 : index
    %c0_72 = arith.constant 0 : index
    %78 = vector.load %arg9[%c0_69, %c3_70, %c0_71, %c0_72] : memref<1x4x128x8xbf16, #tpu.memory_space<vmem>>, vector<1x1x128x8xbf16>
    %79 = vector.shape_cast %78 : vector<1x1x128x8xbf16> to vector<128x8xbf16>
    %80 = vector.shape_cast %77 : vector<128x8xbf16> to vector<1x1x128x8xbf16>
    tpu.vector_store %arg9[%c0_69, %c3_70, %c0_71, %c0_72], %80 {strides = array<i32>} : memref<1x4x128x8xbf16, #tpu.memory_space<vmem>>, vector<1x1x128x8xbf16>,
    return
  }
  func.func @transform_0(%arg0: i32, %arg1: i32) -> (i32, i32, i32) {
    %c0_i32 = arith.constant 0 : i32
    %c0_i32_0 = arith.constant 0 : i32
    return %arg0, %arg1, %c0_i32 : i32, i32, i32
  }
  func.func @transform_1(%arg0: i32, %arg1: i32) -> (i32, i32, i32) {
    %c0_i32 = arith.constant 0 : i32
    %c0_i32_0 = arith.constant 0 : i32
    return %arg0, %arg1, %c0_i32 : i32, i32, i32
  }
  func.func @transform_2(%arg0: i32, %arg1: i32) -> (i32, i32, i32) {
    %c0_i32 = arith.constant 0 : i32
    %c0_i32_0 = arith.constant 0 : i32
    return %arg0, %arg1, %c0_i32 : i32, i32, i32
  }
  func.func @transform_3(%arg0: i32, %arg1: i32) -> (i32, i32, i32) {
    %c0_i32 = arith.constant 0 : i32
    %c0_i32_0 = arith.constant 0 : i32
    %c0_i32_1 = arith.constant 0 : i32
    %c0_i32_2 = arith.constant 0 : i32
    return %c0_i32, %c0_i32_0, %c0_i32_1 : i32, i32, i32
  }
  func.func @transform_4(%arg0: i32, %arg1: i32) -> (i32, i32, i32) {
    %c0_i32 = arith.constant 0 : i32
    %c0_i32_0 = arith.constant 0 : i32
    %c0_i32_1 = arith.constant 0 : i32
    %c0_i32_2 = arith.constant 0 : i32
    return %c0_i32, %c0_i32_0, %c0_i32_1 : i32, i32, i32
  }
  func.func @transform_5(%arg0: i32, %arg1: i32) -> (i32, i32, i32, i32) {
    %c0_i32 = arith.constant 0 : i32
    %c0_i32_0 = arith.constant 0 : i32
    %c0_i32_1 = arith.constant 0 : i32
    return %arg0, %c0_i32, %arg1, %c0_i32_0 : i32, i32, i32, i32
  }
  func.func @transform_6(%arg0: i32, %arg1: i32) -> (i32, i32, i32, i32) {
    %c0_i32 = arith.constant 0 : i32
    %c0_i32_0 = arith.constant 0 : i32
    %c0_i32_1 = arith.constant 0 : i32
    return %arg0, %c0_i32, %arg1, %c0_i32_0 : i32, i32, i32, i32
  }
  func.func @transform_7(%arg0: i32, %arg1: i32) -> (i32, i32, i32, i32) {
    %c0_i32 = arith.constant 0 : i32
    %c0_i32_0 = arith.constant 0 : i32
    %c0_i32_1 = arith.constant 0 : i32
    return %arg0, %c0_i32, %arg1, %c0_i32_0 : i32, i32, i32, i32
  }
}

</mosaic_0001>

<llo_original>
// kernel: tpu_custom_call.1
$region0: #{tpu_custom_call.1}
  #allocation0 [shape = 'u32[]', space=smem, size = 0x4, offset = 0x4, fixed_abs, tag = 'smem constant byte address 0x4 - core index']
  #allocation1 [shape = 'u32[72,128]{1,0:T(1,128)}', space=vmem, size = 0x9000, scoped, tag = 'internal scratch']
  %s0 = inlined_call_operand.vmem [shape: f32[2,128,32], index: 0, kind: input, shape index: {}]
  %s1 = inlined_call_operand.vmem [shape: f32[2,128,32], index: 1, kind: input, shape index: {}]
  %s2 = inlined_call_operand.vmem [shape: f32[2,128,32], index: 2, kind: input, shape index: {}]
  %s3 = inlined_call_operand.vmem [shape: bf16[3,32,32], index: 3, kind: input, shape index: {}]
  %s4 = inlined_call_operand.vmem [shape: f32[3,1,32], index: 4, kind: input, shape index: {}]
  %s5 = inlined_call_operand.vmem [shape: bf16[2,4,128,8], index: 5, kind: output, shape index: {0}]
  %s6 = inlined_call_operand.vmem [shape: bf16[2,4,128,8], index: 6, kind: output, shape index: {1}]
  %s7 = inlined_call_operand.vmem [shape: bf16[2,4,128,8], index: 7, kind: output, shape index: {2}]
  %8 = xla_tuple %s5, %s6, %s7
  %s9 = sld [smem:[#allocation0]]
  $region69: #{tpu_custom_call.1} parent=0
    _
  %s11 = ssub.s32 1, %s9
  %s12 = scalar_select 0, %s11, %s9
  loop: start=0, step=1, limit=4
  $region2: #{tpu_custom_call.1} parent=0 // loop_pre_header
    _
  $region3: #{tpu_custom_call.1} parent=0 // loop_header
    %s14 = sphi 0, %s18
    %p15 = scmp.ge.s32.totalorder %s14, 4
    %s21 = sphi 0, %s33
    %s22 = sphi 0, %s29
    %s23 = sphi 0, %s21
    %s24 = sphi 0, %s22
    %s25 = sphi 0, %s23
    %s26 = sphi 0, %s24
    %s38 = sphi 0, %s40
    %s41 = sphi 0, %s38
    %s42 = sphi 0, %s41
    %s58 = sphi 0, %s42
    %s66 = sphi 0, %s68
    %s69 = sphi 0, %s66
    %s70 = sphi 0, %s69
    %s86 = sphi 0, %s70
    %s94 = sphi 0, %s96
    %s97 = sphi 0, %s94
    %s98 = sphi 0, %s97
    %s114 = sphi 0, %s98
    %s118 = sphi 0, %s118
    %s120 = sphi 0, %s118
    %s121 = sphi 0, %s120
    %s135 = sphi 0, %s121
    %s139 = sphi 0, %s139
    %s141 = sphi 0, %s139
    %s142 = sphi 0, %s141
    %s156 = sphi 0, %s142
    %s164 = sphi 0, %s166
    %s167 = sphi 0, %s164
    %s168 = sphi 0, %s167
    %s184 = sphi 0, %s168
    %s192 = sphi 0, %s194
    %s195 = sphi 0, %s192
    %s196 = sphi 0, %s195
    %s212 = sphi 0, %s196
    %s220 = sphi 0, %s222
    %s223 = sphi 0, %s220
    %s224 = sphi 0, %s223
    %s240 = sphi 0, %s224
  $region4: #{tpu_custom_call.1} parent=0 // loop_header_branch
    %17 = sbr.rel (%p15) target = $region8
  $region5: #{tpu_custom_call.1} parent=0 // loop_body
    %s19 = ssub.s32 %s14, 1
    %s20 = ssub.s32 %s14, 2
    %s27 = sadd.s32 1, %s22
    %p28 = scmp.ge.s32.totalorder %s27, 1
    %s29 = scalar_select %p28, 0, %s27
    %s30 = sadd.s32 1, %s21
    %s31 = scalar_select %p28, %s30, %s21
    %p32 = scmp.ge.s32.totalorder %s31, 2
    %s33 = scalar_select %p32, 0, %s31
    %s34 = ssub.s32 %s21, %s33
    %s35 = ssub.s32 %s22, %s29
    %s36 = sor.u32 %s34, %s35
    %p37 = scmp.eq.s32.totalorder %s36, 0
    %s39 = sadd.s32 %s38, 1
    %s40 = scalar_select %p37, %s38, %s39
    %p43 = pneg %p37
    %p44 = scmp.eq.s32.totalorder %s14, 1
    %p45 = por %p43, %p44
    %p46 = scmp.ne.s32.totalorder %s38, %s41
    %p47 = scmp.eq.s32.totalorder %s14, 0
    %p48 = por %p46, %p47
    %p49 = scmp.ne.s32.totalorder %s38, %s41
    %p50 = scmp.eq.s32.totalorder %s19, 1
    %p51 = por %p49, %p50
    %p52 = scmp.ne.s32.totalorder %s41, %s42
    %p53 = scmp.eq.s32.totalorder %s19, 0
    %p54 = por %p52, %p53
    %p55 = scmp.ne.s32.totalorder %s41, %s42
    %p56 = scmp.eq.s32.totalorder %s20, 1
    %p57 = por %p55, %p56
    %p59 = scmp.ne.s32.totalorder %s42, %s58
    %p60 = scmp.eq.s32.totalorder %s20, 0
    %p61 = por %p59, %p60
    %s62 = ssub.s32 %s21, %s33
    %s63 = ssub.s32 %s22, %s29
    %s64 = sor.u32 %s62, %s63
    %p65 = scmp.eq.s32.totalorder %s64, 0
    %s67 = sadd.s32 %s66, 1
    %s68 = scalar_select %p65, %s66, %s67
    %p71 = pneg %p65
    %p72 = scmp.eq.s32.totalorder %s14, 1
    %p73 = por %p71, %p72
    %p74 = scmp.ne.s32.totalorder %s66, %s69
    %p75 = scmp.eq.s32.totalorder %s14, 0
    %p76 = por %p74, %p75
    %p77 = scmp.ne.s32.totalorder %s66, %s69
    %p78 = scmp.eq.s32.totalorder %s19, 1
    %p79 = por %p77, %p78
    %p80 = scmp.ne.s32.totalorder %s69, %s70
    %p81 = scmp.eq.s32.totalorder %s19, 0
    %p82 = por %p80, %p81
    %p83 = scmp.ne.s32.totalorder %s69, %s70
    %p84 = scmp.eq.s32.totalorder %s20, 1
    %p85 = por %p83, %p84
    %p87 = scmp.ne.s32.totalorder %s70, %s86
    %p88 = scmp.eq.s32.totalorder %s20, 0
    %p89 = por %p87, %p88
    %s90 = ssub.s32 %s21, %s33
    %s91 = ssub.s32 %s22, %s29
    %s92 = sor.u32 %s90, %s91
    %p93 = scmp.eq.s32.totalorder %s92, 0
    %s95 = sadd.s32 %s94, 1
    %s96 = scalar_select %p93, %s94, %s95
    %p99 = pneg %p93
    %p100 = scmp.eq.s32.totalorder %s14, 1
    %p101 = por %p99, %p100
    %p102 = scmp.ne.s32.totalorder %s94, %s97
    %p103 = scmp.eq.s32.totalorder %s14, 0
    %p104 = por %p102, %p103
    %p105 = scmp.ne.s32.totalorder %s94, %s97
    %p106 = scmp.eq.s32.totalorder %s19, 1
    %p107 = por %p105, %p106
    %p108 = scmp.ne.s32.totalorder %s97, %s98
    %p109 = scmp.eq.s32.totalorder %s19, 0
    %p110 = por %p108, %p109
    %p111 = scmp.ne.s32.totalorder %s97, %s98
    %p112 = scmp.eq.s32.totalorder %s20, 1
    %p113 = por %p111, %p112
    %p115 = scmp.ne.s32.totalorder %s98, %s114
    %p116 = scmp.eq.s32.totalorder %s20, 0
    %p117 = por %p115, %p116
    %s119 = sadd.s32 %s118, 1
    %p122 = scmp.eq.s32.totalorder %s14, 1
    %p123 = scmp.ne.s32.totalorder %s118, %s120
    %p124 = scmp.eq.s32.totalorder %s14, 0
    %p125 = por %p123, %p124
    %p126 = scmp.ne.s32.totalorder %s118, %s120
    %p127 = scmp.eq.s32.totalorder %s19, 1
    %p128 = por %p126, %p127
    %p129 = scmp.ne.s32.totalorder %s120, %s121
    %p130 = scmp.eq.s32.totalorder %s19, 0
    %p131 = por %p129, %p130
    %p132 = scmp.ne.s32.totalorder %s120, %s121
    %p133 = scmp.eq.s32.totalorder %s20, 1
    %p134 = por %p132, %p133
    %p136 = scmp.ne.s32.totalorder %s121, %s135
    %p137 = scmp.eq.s32.totalorder %s20, 0
    %p138 = por %p136, %p137
    %s140 = sadd.s32 %s139, 1
    %p143 = scmp.eq.s32.totalorder %s14, 1
    %p144 = scmp.ne.s32.totalorder %s139, %s141
    %p145 = scmp.eq.s32.totalorder %s14, 0
    %p146 = por %p144, %p145
    %p147 = scmp.ne.s32.totalorder %s139, %s141
    %p148 = scmp.eq.s32.totalorder %s19, 1
    %p149 = por %p147, %p148
    %p150 = scmp.ne.s32.totalorder %s141, %s142
    %p151 = scmp.eq.s32.totalorder %s19, 0
    %p152 = por %p150, %p151
    %p153 = scmp.ne.s32.totalorder %s141, %s142
    %p154 = scmp.eq.s32.totalorder %s20, 1
    %p155 = por %p153, %p154
    %p157 = scmp.ne.s32.totalorder %s142, %s156
    %p158 = scmp.eq.s32.totalorder %s20, 0
    %p159 = por %p157, %p158
    %s160 = ssub.s32 %s21, %s33
    %s161 = ssub.s32 %s22, %s29
    %s162 = sor.u32 %s160, %s161
    %p163 = scmp.eq.s32.totalorder %s162, 0
    %s165 = sadd.s32 %s164, 1
    %s166 = scalar_select %p163, %s164, %s165
    %p169 = pneg %p163
    %p170 = scmp.eq.s32.totalorder %s14, 1
    %p171 = por %p169, %p170
    %p172 = scmp.ne.s32.totalorder %s164, %s167
    %p173 = scmp.eq.s32.totalorder %s14, 0
    %p174 = por %p172, %p173
    %p175 = scmp.ne.s32.totalorder %s164, %s167
    %p176 = scmp.eq.s32.totalorder %s19, 1
    %p177 = por %p175, %p176
    %p178 = scmp.ne.s32.totalorder %s167, %s168
    %p179 = scmp.eq.s32.totalorder %s19, 0
    %p180 = por %p178, %p179
    %p181 = scmp.ne.s32.totalorder %s167, %s168
    %p182 = scmp.eq.s32.totalorder %s20, 1
    %p183 = por %p181, %p182
    %p185 = scmp.ne.s32.totalorder %s168, %s184
    %p186 = scmp.eq.s32.totalorder %s20, 0
    %p187 = por %p185, %p186
    %s188 = ssub.s32 %s21, %s33
    %s189 = ssub.s32 %s22, %s29
    %s190 = sor.u32 %s188, %s189
    %p191 = scmp.eq.s32.totalorder %s190, 0
    %s193 = sadd.s32 %s192, 1
    %s194 = scalar_select %p191, %s192, %s193
    %p197 = pneg %p191
    %p198 = scmp.eq.s32.totalorder %s14, 1
    %p199 = por %p197, %p198
    %p200 = scmp.ne.s32.totalorder %s192, %s195
    %p201 = scmp.eq.s32.totalorder %s14, 0
    %p202 = por %p200, %p201
    %p203 = scmp.ne.s32.totalorder %s192, %s195
    %p204 = scmp.eq.s32.totalorder %s19, 1
    %p205 = por %p203, %p204
    %p206 = scmp.ne.s32.totalorder %s195, %s196
    %p207 = scmp.eq.s32.totalorder %s19, 0
    %p208 = por %p206, %p207
    %p209 = scmp.ne.s32.totalorder %s195, %s196
    %p210 = scmp.eq.s32.totalorder %s20, 1
    %p211 = por %p209, %p210
    %p213 = scmp.ne.s32.totalorder %s196, %s212
    %p214 = scmp.eq.s32.totalorder %s20, 0
    %p215 = por %p213, %p214
    %s216 = ssub.s32 %s21, %s33
    %s217 = ssub.s32 %s22, %s29
    %s218 = sor.u32 %s216, %s217
    %p219 = scmp.eq.s32.totalorder %s218, 0
    %s221 = sadd.s32 %s220, 1
    %s222 = scalar_select %p219, %s220, %s221
    %p225 = pneg %p219
    %p226 = scmp.eq.s32.totalorder %s14, 1
    %p227 = por %p225, %p226
    %p228 = scmp.ne.s32.totalorder %s220, %s223
    %p229 = scmp.eq.s32.totalorder %s14, 0
    %p230 = por %p228, %p229
    %p231 = scmp.ne.s32.totalorder %s220, %s223
    %p232 = scmp.eq.s32.totalorder %s19, 1
    %p233 = por %p231, %p232
    %p234 = scmp.ne.s32.totalorder %s223, %s224
    %p235 = scmp.eq.s32.totalorder %s19, 0
    %p236 = por %p234, %p235
    %p237 = scmp.ne.s32.totalorder %s223, %s224
    %p238 = scmp.eq.s32.totalorder %s20, 1
    %p239 = por %p237, %p238
    %p241 = scmp.ne.s32.totalorder %s224, %s240
    %p242 = scmp.eq.s32.totalorder %s20, 0
    %p243 = por %p241, %p242
    %p244 = scmp.le.s32.totalorder 1, %s14
    %p245 = scmp.lt.s32.totalorder %s14, 3
    %p246 = pnand %p244, %p245
    %p247 = pneg %p246
    // Predicated region
    $region9: #{tpu_custom_call.1} parent=5 // pred_check
      _
    $region10: #{tpu_custom_call.1} parent=5 // pred_check_branch
      %249 = sbr.rel (%p246) target = $region12
    $region11: #{tpu_custom_call.1} parent=5 // pred_region
      %s250 = ssub.s32 %s14, 1
      // Predicated region
      $region13: #{tpu_custom_call.1} parent=11 // pred_check
        %p251 = pneg %p131
      $region14: #{tpu_custom_call.1} parent=11 // pred_check_branch
        %253 = sbr.rel (%p251) target = $region16
      $region15: #{tpu_custom_call.1} parent=11 // pred_region
        _
      $region16: #{tpu_custom_call.1} parent=11 // pred_fallthru
        _
      // Predicated region
      $region17: #{tpu_custom_call.1} parent=11 // pred_check
        %p254 = pneg %p152
      $region18: #{tpu_custom_call.1} parent=11 // pred_check_branch
        %256 = sbr.rel (%p254) target = $region20
      $region19: #{tpu_custom_call.1} parent=11 // pred_region
        _
      $region20: #{tpu_custom_call.1} parent=11 // pred_fallthru
        _
    $region12: #{tpu_custom_call.1} parent=5 // pred_fallthru
      _
    %p257 = scmp.lt.s32.totalorder %s14, 2
    // Predicated region
    $region21: #{tpu_custom_call.1} parent=5 // pred_check
      %p258 = pneg %p257
    $region22: #{tpu_custom_call.1} parent=5 // pred_check_branch
      %260 = sbr.rel (%p258) target = $region24
    $region23: #{tpu_custom_call.1} parent=5 // pred_region
      // Predicated region
      $region25: #{tpu_custom_call.1} parent=23 // pred_check
        %p261 = pneg %p48
      $region26: #{tpu_custom_call.1} parent=23 // pred_check_branch
        %263 = sbr.rel (%p261) target = $region28
      $region27: #{tpu_custom_call.1} parent=23 // pred_region
        %s264 = smul.u32 16, %s22
        %p265 = scmp.lt.s32.totalorder %s21, 1
        %s266 = scalar_select %p265, %s21, 1
        %p267 = scmp.lt.s32.totalorder %s264, 15
        %s268 = scalar_select %p267, %s264, 15
        %s269 = smul.addr %s266, 16
        %s270 = sadd.s32 %s268, %s269
        %s271 = smul.addr %s270, 8
        %s272 = scalar_lea.vmem %s0, %s271
        %s273 = smul.u32 16, %s22
      $region28: #{tpu_custom_call.1} parent=23 // pred_fallthru
        _
      // Predicated region
      $region29: #{tpu_custom_call.1} parent=23 // pred_check
        %p274 = pneg %p76
      $region30: #{tpu_custom_call.1} parent=23 // pred_check_branch
        %276 = sbr.rel (%p274) target = $region32
      $region31: #{tpu_custom_call.1} parent=23 // pred_region
        %s277 = smul.u32 16, %s22
        %p278 = scmp.lt.s32.totalorder %s21, 1
        %s279 = scalar_select %p278, %s21, 1
        %p280 = scmp.lt.s32.totalorder %s277, 15
        %s281 = scalar_select %p280, %s277, 15
        %s282 = smul.addr %s279, 16
        %s283 = sadd.s32 %s281, %s282
        %s284 = smul.addr %s283, 8
        %s285 = scalar_lea.vmem %s1, %s284
        %s286 = smul.u32 16, %s22
      $region32: #{tpu_custom_call.1} parent=23 // pred_fallthru
        _
      // Predicated region
      $region33: #{tpu_custom_call.1} parent=23 // pred_check
        %p287 = pneg %p104
      $region34: #{tpu_custom_call.1} parent=23 // pred_check_branch
        %289 = sbr.rel (%p287) target = $region36
      $region35: #{tpu_custom_call.1} parent=23 // pred_region
        %s290 = smul.u32 16, %s22
        %p291 = scmp.lt.s32.totalorder %s21, 1
        %s292 = scalar_select %p291, %s21, 1
        %p293 = scmp.lt.s32.totalorder %s290, 15
        %s294 = scalar_select %p293, %s290, 15
        %s295 = smul.addr %s292, 16
        %s296 = sadd.s32 %s294, %s295
        %s297 = smul.addr %s296, 8
        %s298 = scalar_lea.vmem %s2, %s297
        %s299 = smul.u32 16, %s22
      $region36: #{tpu_custom_call.1} parent=23 // pred_fallthru
        _
    $region24: #{tpu_custom_call.1} parent=5 // pred_fallthru
      _
    %p300 = scmp.le.s32.totalorder 1, %s14
    %p301 = scmp.lt.s32.totalorder %s14, 3
    %p302 = pnand %p300, %p301
    %p303 = pneg %p302
    // Predicated region
    $region37: #{tpu_custom_call.1} parent=5 // pred_check
      _
    $region38: #{tpu_custom_call.1} parent=5 // pred_check_branch
      %305 = sbr.rel (%p302) target = $region40
    $region39: #{tpu_custom_call.1} parent=5 // pred_region
      %s306 = ssub.s32 %s14, 1
      %s307 = smul.u32 16, %s24
      %p308 = scmp.lt.s32.totalorder %s23, 1
      %s309 = scalar_select %p308, %s23, 1
      %p310 = scmp.lt.s32.totalorder %s307, 15
      %s311 = scalar_select %p310, %s307, 15
      %s312 = smul.addr %s309, 16
      %s313 = sadd.s32 %s311, %s312
      %s314 = smul.addr %s313, 8
      %s315 = scalar_lea.vmem %s0, %s314
      %p316 = pneg %p54
      %p317 = pneg %p51
      %s318 = smul.u32 16, %s24
      %p319 = scmp.lt.s32.totalorder %s23, 1
      %s320 = scalar_select %p319, %s23, 1
      %p321 = scmp.lt.s32.totalorder %s318, 15
      %s322 = scalar_select %p321, %s318, 15
      %s323 = smul.addr %s320, 16
      %s324 = sadd.s32 %s322, %s323
      %s325 = smul.addr %s324, 8
      %s326 = scalar_lea.vmem %s1, %s325
      %p327 = pneg %p82
      %p328 = pneg %p79
      %s329 = smul.u32 16, %s24
      %p330 = scmp.lt.s32.totalorder %s23, 1
      %s331 = scalar_select %p330, %s23, 1
      %p332 = scmp.lt.s32.totalorder %s329, 15
      %s333 = scalar_select %p332, %s329, 15
      %s334 = smul.addr %s331, 16
      %s335 = sadd.s32 %s333, %s334
      %s336 = smul.addr %s335, 8
      %s337 = scalar_lea.vmem %s2, %s336
      %p338 = pneg %p110
      %p339 = pneg %p107
      %p340 = pneg %p131
      %p341 = pneg %p128
      %p342 = pneg %p152
      %p343 = pneg %p149
      %p344 = pneg %p180
      %p345 = pneg %p177
      %s346 = smul.u32 16, %s24
      %p347 = scmp.lt.s32.totalorder %s23, 1
      %s348 = scalar_select %p347, %s23, 1
      %p349 = scmp.lt.s32.totalorder %s346, 15
      %s350 = scalar_select %p349, %s346, 15
      %s351 = smul.addr %s348, 64
      %s352 = sadd.s32 %s350, %s351
      %s353 = smul.addr %s352, 4
      %s354 = scalar_lea.vmem %s5, %s353
      %p355 = pneg %p208
      %p356 = pneg %p205
      %s357 = smul.u32 16, %s24
      %p358 = scmp.lt.s32.totalorder %s23, 1
      %s359 = scalar_select %p358, %s23, 1
      %p360 = scmp.lt.s32.totalorder %s357, 15
      %s361 = scalar_select %p360, %s357, 15
      %s362 = smul.addr %s359, 64
      %s363 = sadd.s32 %s361, %s362
      %s364 = smul.addr %s363, 4
      %s365 = scalar_lea.vmem %s6, %s364
      %p366 = pneg %p236
      %p367 = pneg %p233
      %s368 = smul.u32 16, %s24
      %p369 = scmp.lt.s32.totalorder %s23, 1
      %s370 = scalar_select %p369, %s23, 1
      %p371 = scmp.lt.s32.totalorder %s368, 15
      %s372 = scalar_select %p371, %s368, 15
      %s373 = smul.addr %s370, 64
      %s374 = sadd.s32 %s372, %s373
      %s375 = smul.addr %s374, 4
      %s376 = scalar_lea.vmem %s7, %s375
      %s377 = smul.u32 16, %s24
      %p378 = scmp.lt.s32.totalorder %s23, 1
      %s379 = scalar_select %p378, %s23, 1
      %p380 = scmp.lt.s32.totalorder %s377, 15
      %s381 = scalar_select %p380, %s377, 15
      %s382 = smul.addr %s379, 16
      %s383 = sadd.s32 %s381, %s382
      %s384 = smul.addr %s383, 8
      %s385 = scalar_lea.vmem %s0, %s384
      %s386 = smul.u32 16, %s24
      %s387 = smul.u32 16, %s24
      %p388 = scmp.lt.s32.totalorder %s23, 1
      %s389 = scalar_select %p388, %s23, 1
      %p390 = scmp.lt.s32.totalorder %s387, 15
      %s391 = scalar_select %p390, %s387, 15
      %s392 = smul.addr %s389, 16
      %s393 = sadd.s32 %s391, %s392
      %s394 = smul.addr %s393, 8
      %s395 = scalar_lea.vmem %s1, %s394
      %s396 = smul.u32 16, %s24
      %s397 = smul.u32 16, %s24
      %p398 = scmp.lt.s32.totalorder %s23, 1
      %s399 = scalar_select %p398, %s23, 1
      %p400 = scmp.lt.s32.totalorder %s397, 15
      %s401 = scalar_select %p400, %s397, 15
      %s402 = smul.addr %s399, 16
      %s403 = sadd.s32 %s401, %s402
      %s404 = smul.addr %s403, 8
      %s405 = scalar_lea.vmem %s2, %s404
      %s406 = smul.u32 16, %s24
      %s407 = smul.u32 16, %s24
      %p408 = scmp.lt.s32.totalorder %s23, 1
      %s409 = scalar_select %p408, %s23, 1
      %p410 = scmp.lt.s32.totalorder %s407, 15
      %s411 = scalar_select %p410, %s407, 15
      %s412 = smul.addr %s409, 64
      %s413 = sadd.s32 %s411, %s412
      %s414 = smul.addr %s413, 4
      %s415 = scalar_lea.vmem %s5, %s414
      %s416 = smul.u32 16, %s24
      %s417 = smul.u32 16, %s24
      %p418 = scmp.lt.s32.totalorder %s23, 1
      %s419 = scalar_select %p418, %s23, 1
      %p420 = scmp.lt.s32.totalorder %s417, 15
      %s421 = scalar_select %p420, %s417, 15
      %s422 = smul.addr %s419, 64
      %s423 = sadd.s32 %s421, %s422
      %s424 = smul.addr %s423, 4
      %s425 = scalar_lea.vmem %s6, %s424
      %s426 = smul.u32 16, %s24
      %s427 = smul.u32 16, %s24
      %p428 = scmp.lt.s32.totalorder %s23, 1
      %s429 = scalar_select %p428, %s23, 1
      %p430 = scmp.lt.s32.totalorder %s427, 15
      %s431 = scalar_select %p430, %s427, 15
      %s432 = smul.addr %s429, 64
      %s433 = sadd.s32 %s431, %s432
      %s434 = smul.addr %s433, 4
      %s435 = scalar_lea.vmem %s7, %s434
      %s436 = smul.u32 16, %s24
      %v438 = vld [vmem:[%s385] sm:$0xff]
      %v439 = vld [vmem:[%s385 + $0x8] sm:$0xff]
      %v440 = vld [vmem:[%s385 + $0x10] sm:$0xff]
      %v441 = vld [vmem:[%s385 + $0x18] sm:$0xff]
      %v442 = vld [vmem:[%s385 + $0x20] sm:$0xff]
      %v443 = vld [vmem:[%s385 + $0x28] sm:$0xff]
      %v444 = vld [vmem:[%s385 + $0x30] sm:$0xff]
      %v445 = vld [vmem:[%s385 + $0x38] sm:$0xff]
      %v446 = vld [vmem:[%s385 + $0x40] sm:$0xff]
      %v447 = vld [vmem:[%s385 + $0x48] sm:$0xff]
      %v448 = vld [vmem:[%s385 + $0x50] sm:$0xff]
      %v449 = vld [vmem:[%s385 + $0x58] sm:$0xff]
      %v450 = vld [vmem:[%s385 + $0x60] sm:$0xff]
      %v451 = vld [vmem:[%s385 + $0x68] sm:$0xff]
      %v452 = vld [vmem:[%s385 + $0x70] sm:$0xff]
      %v453 = vld [vmem:[%s385 + $0x78] sm:$0xff]
      %v454 = vpack.c.bf16 %v439, %v438
      %v455 = vpack.c.bf16 %v441, %v440
      %v456 = vpack.c.bf16 %v443, %v442
      %v457 = vpack.c.bf16 %v445, %v444
      %v458 = vpack.c.bf16 %v447, %v446
      %v459 = vpack.c.bf16 %v449, %v448
      %v460 = vpack.c.bf16 %v451, %v450
      %v461 = vpack.c.bf16 %v453, %v452
      %v462 = vld [vmem:[%s3] sm:$0xf]
      %v463 = vld [vmem:[%s3 + $0x4] sm:$0xf]
      %v464 = vld [vmem:[%s3 + $0x8] sm:$0xf]
      %v465 = vld [vmem:[%s3 + $0xc] sm:$0xf]
      %v466 = vld [vmem:[%s4] sm:$0x1]
      %v468 = vperm.slane %v466, 0
      %v474 = vunpack.c.l.b16 %v462
      %v475 = vunpack.c.l.b16 %v463
      %v476 = vunpack.c.l.b16 %v464
      %v477 = vunpack.c.l.b16 %v465
      %v478 = vpack.c.b16 %v475, %v474
      %v479 = vpack.c.b16 %v477, %v476
      %vm482 = vcmask 261120
      %v484 = vsel %vm482, %v454, 0
      %v487 = vsel %vm482, %v455, 0
      %v490 = vsel %vm482, %v456, 0
      %v493 = vsel %vm482, %v457, 0
      %v496 = vsel %vm482, %v458, 0
      %v499 = vsel %vm482, %v459, 0
      %v502 = vsel %vm482, %v460, 0
      %v505 = vsel %vm482, %v461, 0
      %507 = vmatpush.bf16.msra.mxu0 0
      %508 = vmatpush.bf16.msra.mxu0 0
      %509 = vmatpush.bf16.msra.mxu0 0
      %510 = vmatpush.bf16.msra.mxu0 0
      %511 = vmatpush.bf16.msra.mxu0 0
      %512 = vmatpush.bf16.msra.mxu0 0
      %513 = vmatpush.bf16.msra.mxu0 %v479
      %514 = vmatpush.bf16.msra.mxu0 %v478
      %515 = vmatmul.bf16.gmra.mxu0 %v484
      %v516 = vpop.f32.mrf.mxu0
      %v517 = vadd.f32 %v468, %v516
      %v518 = vpop.f32.mrf.mxu0
      %v519 = vadd.f32 %v468, %v518
      %520 = vmatmul.bf16.gmra.mxu0 %v487
      %v521 = vpop.f32.mrf.mxu0
      %v522 = vadd.f32 %v468, %v521
      %v523 = vpop.f32.mrf.mxu0
      %v524 = vadd.f32 %v468, %v523
      %525 = vmatmul.bf16.gmra.mxu0 %v490
      %v526 = vpop.f32.mrf.mxu0
      %v527 = vadd.f32 %v468, %v526
      %v528 = vpop.f32.mrf.mxu0
      %v529 = vadd.f32 %v468, %v528
      %530 = vmatmul.bf16.gmra.mxu0 %v493
      %v531 = vpop.f32.mrf.mxu0
      %v532 = vadd.f32 %v468, %v531
      %v533 = vpop.f32.mrf.mxu0
      %v534 = vadd.f32 %v468, %v533
      %535 = vmatmul.bf16.gmra.mxu0 %v496
      %v536 = vpop.f32.mrf.mxu0
      %v537 = vadd.f32 %v468, %v536
      %v538 = vpop.f32.mrf.mxu0
      %v539 = vadd.f32 %v468, %v538
      %540 = vmatmul.bf16.gmra.mxu0 %v499
      %v541 = vpop.f32.mrf.mxu0
      %v542 = vadd.f32 %v468, %v541
      %v543 = vpop.f32.mrf.mxu0
      %v544 = vadd.f32 %v468, %v543
      %545 = vmatmul.bf16.gmra.mxu0 %v502
      %v546 = vpop.f32.mrf.mxu0
      %v547 = vadd.f32 %v468, %v546
      %v548 = vpop.f32.mrf.mxu0
      %v549 = vadd.f32 %v468, %v548
      %550 = vmatmul.bf16.gmra.mxu0 %v505
      %v551 = vpop.f32.mrf.mxu0
      %v552 = vadd.f32 %v468, %v551
      %v553 = vpop.f32.mrf.mxu0
      %v554 = vadd.f32 %v468, %v553
      %555 = vdwg.mxu0
      %v556 = vpack.c.bf16 %v517, %v517
      %v557 = vpack.c.bf16 %v519, %v519
      %v558 = vpack.c.bf16 %v522, %v522
      %v559 = vpack.c.bf16 %v524, %v524
      %v560 = vpack.c.bf16 %v527, %v527
      %v561 = vpack.c.bf16 %v529, %v529
      %v562 = vpack.c.bf16 %v532, %v532
      %v563 = vpack.c.bf16 %v534, %v534
      %v564 = vpack.c.bf16 %v537, %v537
      %v565 = vpack.c.bf16 %v539, %v539
      %v566 = vpack.c.bf16 %v542, %v542
      %v567 = vpack.c.bf16 %v544, %v544
      %v568 = vpack.c.bf16 %v547, %v547
      %v569 = vpack.c.bf16 %v549, %v549
      %v570 = vpack.c.bf16 %v552, %v552
      %v571 = vpack.c.bf16 %v554, %v554
      %vm572 = vcmask 60416
      %573 = vst.msk [vmem:[%s415] sm:$0xf] %vm572, %v556
      %574 = vst.msk [vmem:[%s415 + $0x4] sm:$0xf] %vm572, %v557
      %575 = vst.msk [vmem:[%s415 + $0x8] sm:$0xf] %vm572, %v558
      %576 = vst.msk [vmem:[%s415 + $0xc] sm:$0xf] %vm572, %v559
      %577 = vst.msk [vmem:[%s415 + $0x10] sm:$0xf] %vm572, %v560
      %578 = vst.msk [vmem:[%s415 + $0x14] sm:$0xf] %vm572, %v561
      %579 = vst.msk [vmem:[%s415 + $0x18] sm:$0xf] %vm572, %v562
      %580 = vst.msk [vmem:[%s415 + $0x1c] sm:$0xf] %vm572, %v563
      %581 = vst.msk [vmem:[%s415 + $0x20] sm:$0xf] %vm572, %v564
      %582 = vst.msk [vmem:[%s415 + $0x24] sm:$0xf] %vm572, %v565
      %583 = vst.msk [vmem:[%s415 + $0x28] sm:$0xf] %vm572, %v566
      %584 = vst.msk [vmem:[%s415 + $0x2c] sm:$0xf] %vm572, %v567
      %585 = vst.msk [vmem:[%s415 + $0x30] sm:$0xf] %vm572, %v568
      %586 = vst.msk [vmem:[%s415 + $0x34] sm:$0xf] %vm572, %v569
      %587 = vst.msk [vmem:[%s415 + $0x38] sm:$0xf] %vm572, %v570
      %588 = vst.msk [vmem:[%s415 + $0x3c] sm:$0xf] %vm572, %v571
      %605 = vrot.lane.b32.xlu0 %v556, 120
      %v606 = vpop.permute.xlu0 %605
      %607 = vrot.lane.b32.xlu0 %v557, 120
      %v608 = vpop.permute.xlu0 %607
      %609 = vrot.lane.b32.xlu0 %v558, 120
      %v610 = vpop.permute.xlu0 %609
      %611 = vrot.lane.b32.xlu0 %v559, 120
      %v612 = vpop.permute.xlu0 %611
      %613 = vrot.lane.b32.xlu0 %v560, 120
      %v614 = vpop.permute.xlu0 %613
      %615 = vrot.lane.b32.xlu0 %v561, 120
      %v616 = vpop.permute.xlu0 %615
      %617 = vrot.lane.b32.xlu0 %v562, 120
      %v618 = vpop.permute.xlu0 %617
      %619 = vrot.lane.b32.xlu0 %v563, 120
      %v620 = vpop.permute.xlu0 %619
      %621 = vrot.lane.b32.xlu0 %v564, 120
      %v622 = vpop.permute.xlu0 %621
      %623 = vrot.lane.b32.xlu0 %v565, 120
      %v624 = vpop.permute.xlu0 %623
      %625 = vrot.lane.b32.xlu0 %v566, 120
      %v626 = vpop.permute.xlu0 %625
      %627 = vrot.lane.b32.xlu0 %v567, 120
      %v628 = vpop.permute.xlu0 %627
      %629 = vrot.lane.b32.xlu0 %v568, 120
      %v630 = vpop.permute.xlu0 %629
      %631 = vrot.lane.b32.xlu0 %v569, 120
      %v632 = vpop.permute.xlu0 %631
      %633 = vrot.lane.b32.xlu0 %v570, 120
      %v634 = vpop.permute.xlu0 %633
      %635 = vrot.lane.b32.xlu0 %v571, 120
      %v636 = vpop.permute.xlu0 %635
      %s653 = scalar_lea.vmem %s415, 64
      %654 = vst.msk [vmem:[%s653] sm:$0xf] %vm572, %v606
      %655 = vst.msk [vmem:[%s653 + $0x4] sm:$0xf] %vm572, %v608
      %656 = vst.msk [vmem:[%s653 + $0x8] sm:$0xf] %vm572, %v610
      %657 = vst.msk [vmem:[%s653 + $0xc] sm:$0xf] %vm572, %v612
      %658 = vst.msk [vmem:[%s653 + $0x10] sm:$0xf] %vm572, %v614
      %659 = vst.msk [vmem:[%s653 + $0x14] sm:$0xf] %vm572, %v616
      %660 = vst.msk [vmem:[%s653 + $0x18] sm:$0xf] %vm572, %v618
      %661 = vst.msk [vmem:[%s653 + $0x1c] sm:$0xf] %vm572, %v620
      %662 = vst.msk [vmem:[%s653 + $0x20] sm:$0xf] %vm572, %v622
      %663 = vst.msk [vmem:[%s653 + $0x24] sm:$0xf] %vm572, %v624
      %664 = vst.msk [vmem:[%s653 + $0x28] sm:$0xf] %vm572, %v626
      %665 = vst.msk [vmem:[%s653 + $0x2c] sm:$0xf] %vm572, %v628
      %666 = vst.msk [vmem:[%s653 + $0x30] sm:$0xf] %vm572, %v630
      %667 = vst.msk [vmem:[%s653 + $0x34] sm:$0xf] %vm572, %v632
      %668 = vst.msk [vmem:[%s653 + $0x38] sm:$0xf] %vm572, %v634
      %669 = vst.msk [vmem:[%s653 + $0x3c] sm:$0xf] %vm572, %v636
      %670 = vrot.lane.b32.xlu0 %v556, 112
      %v671 = vpop.permute.xlu0 %670
      %672 = vrot.lane.b32.xlu0 %v557, 112
      %v673 = vpop.permute.xlu0 %672
      %674 = vrot.lane.b32.xlu0 %v558, 112
      %v675 = vpop.permute.xlu0 %674
      %676 = vrot.lane.b32.xlu0 %v559, 112
      %v677 = vpop.permute.xlu0 %676
      %678 = vrot.lane.b32.xlu0 %v560, 112
      %v679 = vpop.permute.xlu0 %678
      %680 = vrot.lane.b32.xlu0 %v561, 112
      %v681 = vpop.permute.xlu0 %680
      %682 = vrot.lane.b32.xlu0 %v562, 112
      %v683 = vpop.permute.xlu0 %682
      %684 = vrot.lane.b32.xlu0 %v563, 112
      %v685 = vpop.permute.xlu0 %684
      %686 = vrot.lane.b32.xlu0 %v564, 112
      %v687 = vpop.permute.xlu0 %686
      %688 = vrot.lane.b32.xlu0 %v565, 112
      %v689 = vpop.permute.xlu0 %688
      %690 = vrot.lane.b32.xlu0 %v566, 112
      %v691 = vpop.permute.xlu0 %690
      %692 = vrot.lane.b32.xlu0 %v567, 112
      %v693 = vpop.permute.xlu0 %692
      %694 = vrot.lane.b32.xlu0 %v568, 112
      %v695 = vpop.permute.xlu0 %694
      %696 = vrot.lane.b32.xlu0 %v569, 112
      %v697 = vpop.permute.xlu0 %696
      %698 = vrot.lane.b32.xlu0 %v570, 112
      %v699 = vpop.permute.xlu0 %698
      %700 = vrot.lane.b32.xlu0 %v571, 112
      %v701 = vpop.permute.xlu0 %700
      %s718 = scalar_lea.vmem %s415, 128
      %719 = vst.msk [vmem:[%s718] sm:$0xf] %vm572, %v671
      %720 = vst.msk [vmem:[%s718 + $0x4] sm:$0xf] %vm572, %v673
      %721 = vst.msk [vmem:[%s718 + $0x8] sm:$0xf] %vm572, %v675
      %722 = vst.msk [vmem:[%s718 + $0xc] sm:$0xf] %vm572, %v677
      %723 = vst.msk [vmem:[%s718 + $0x10] sm:$0xf] %vm572, %v679
      %724 = vst.msk [vmem:[%s718 + $0x14] sm:$0xf] %vm572, %v681
      %725 = vst.msk [vmem:[%s718 + $0x18] sm:$0xf] %vm572, %v683
      %726 = vst.msk [vmem:[%s718 + $0x1c] sm:$0xf] %vm572, %v685
      %727 = vst.msk [vmem:[%s718 + $0x20] sm:$0xf] %vm572, %v687
      %728 = vst.msk [vmem:[%s718 + $0x24] sm:$0xf] %vm572, %v689
      %729 = vst.msk [vmem:[%s718 + $0x28] sm:$0xf] %vm572, %v691
      %730 = vst.msk [vmem:[%s718 + $0x2c] sm:$0xf] %vm572, %v693
      %731 = vst.msk [vmem:[%s718 + $0x30] sm:$0xf] %vm572, %v695
      %732 = vst.msk [vmem:[%s718 + $0x34] sm:$0xf] %vm572, %v697
      %733 = vst.msk [vmem:[%s718 + $0x38] sm:$0xf] %vm572, %v699
      %734 = vst.msk [vmem:[%s718 + $0x3c] sm:$0xf] %vm572, %v701
      %735 = vrot.lane.b32.xlu0 %v556, 104
      %v736 = vpop.permute.xlu0 %735
      %737 = vrot.lane.b32.xlu0 %v557, 104
      %v738 = vpop.permute.xlu0 %737
      %739 = vrot.lane.b32.xlu0 %v558, 104
      %v740 = vpop.permute.xlu0 %739
      %741 = vrot.lane.b32.xlu0 %v559, 104
      %v742 = vpop.permute.xlu0 %741
      %743 = vrot.lane.b32.xlu0 %v560, 104
      %v744 = vpop.permute.xlu0 %743
      %745 = vrot.lane.b32.xlu0 %v561, 104
      %v746 = vpop.permute.xlu0 %745
      %747 = vrot.lane.b32.xlu0 %v562, 104
      %v748 = vpop.permute.xlu0 %747
      %749 = vrot.lane.b32.xlu0 %v563, 104
      %v750 = vpop.permute.xlu0 %749
      %751 = vrot.lane.b32.xlu0 %v564, 104
      %v752 = vpop.permute.xlu0 %751
      %753 = vrot.lane.b32.xlu0 %v565, 104
      %v754 = vpop.permute.xlu0 %753
      %755 = vrot.lane.b32.xlu0 %v566, 104
      %v756 = vpop.permute.xlu0 %755
      %757 = vrot.lane.b32.xlu0 %v567, 104
      %v758 = vpop.permute.xlu0 %757
      %759 = vrot.lane.b32.xlu0 %v568, 104
      %v760 = vpop.permute.xlu0 %759
      %761 = vrot.lane.b32.xlu0 %v569, 104
      %v762 = vpop.permute.xlu0 %761
      %763 = vrot.lane.b32.xlu0 %v570, 104
      %v764 = vpop.permute.xlu0 %763
      %765 = vrot.lane.b32.xlu0 %v571, 104
      %v766 = vpop.permute.xlu0 %765
      %s783 = scalar_lea.vmem %s415, 192
      %784 = vst.msk [vmem:[%s783] sm:$0xf] %vm572, %v736
      %785 = vst.msk [vmem:[%s783 + $0x4] sm:$0xf] %vm572, %v738
      %786 = vst.msk [vmem:[%s783 + $0x8] sm:$0xf] %vm572, %v740
      %787 = vst.msk [vmem:[%s783 + $0xc] sm:$0xf] %vm572, %v742
      %788 = vst.msk [vmem:[%s783 + $0x10] sm:$0xf] %vm572, %v744
      %789 = vst.msk [vmem:[%s783 + $0x14] sm:$0xf] %vm572, %v746
      %790 = vst.msk [vmem:[%s783 + $0x18] sm:$0xf] %vm572, %v748
      %791 = vst.msk [vmem:[%s783 + $0x1c] sm:$0xf] %vm572, %v750
      %792 = vst.msk [vmem:[%s783 + $0x20] sm:$0xf] %vm572, %v752
      %793 = vst.msk [vmem:[%s783 + $0x24] sm:$0xf] %vm572, %v754
      %794 = vst.msk [vmem:[%s783 + $0x28] sm:$0xf] %vm572, %v756
      %795 = vst.msk [vmem:[%s783 + $0x2c] sm:$0xf] %vm572, %v758
      %796 = vst.msk [vmem:[%s783 + $0x30] sm:$0xf] %vm572, %v760
      %797 = vst.msk [vmem:[%s783 + $0x34] sm:$0xf] %vm572, %v762
      %798 = vst.msk [vmem:[%s783 + $0x38] sm:$0xf] %vm572, %v764
      %799 = vst.msk [vmem:[%s783 + $0x3c] sm:$0xf] %vm572, %v766
      %v800 = vld [vmem:[%s395] sm:$0xff]
      %v801 = vld [vmem:[%s395 + $0x8] sm:$0xff]
      %v802 = vld [vmem:[%s395 + $0x10] sm:$0xff]
      %v803 = vld [vmem:[%s395 + $0x18] sm:$0xff]
      %v804 = vld [vmem:[%s395 + $0x20] sm:$0xff]
      %v805 = vld [vmem:[%s395 + $0x28] sm:$0xff]
      %v806 = vld [vmem:[%s395 + $0x30] sm:$0xff]
      %v807 = vld [vmem:[%s395 + $0x38] sm:$0xff]
      %v808 = vld [vmem:[%s395 + $0x40] sm:$0xff]
      %v809 = vld [vmem:[%s395 + $0x48] sm:$0xff]
      %v810 = vld [vmem:[%s395 + $0x50] sm:$0xff]
      %v811 = vld [vmem:[%s395 + $0x58] sm:$0xff]
      %v812 = vld [vmem:[%s395 + $0x60] sm:$0xff]
      %v813 = vld [vmem:[%s395 + $0x68] sm:$0xff]
      %v814 = vld [vmem:[%s395 + $0x70] sm:$0xff]
      %v815 = vld [vmem:[%s395 + $0x78] sm:$0xff]
      %v816 = vpack.c.bf16 %v801, %v800
      %v817 = vpack.c.bf16 %v803, %v802
      %v818 = vpack.c.bf16 %v805, %v804
      %v819 = vpack.c.bf16 %v807, %v806
      %v820 = vpack.c.bf16 %v809, %v808
      %v821 = vpack.c.bf16 %v811, %v810
      %v822 = vpack.c.bf16 %v813, %v812
      %v823 = vpack.c.bf16 %v815, %v814
      %s824 = scalar_lea.vmem %s3, 16
      %v825 = vld [vmem:[%s824] sm:$0xf]
      %v826 = vld [vmem:[%s824 + $0x4] sm:$0xf]
      %v827 = vld [vmem:[%s824 + $0x8] sm:$0xf]
      %v828 = vld [vmem:[%s824 + $0xc] sm:$0xf]
      %s829 = scalar_lea.vmem %s4, 1
      %v830 = vld [vmem:[%s829] sm:$0x1]
      %v832 = vperm.slane %v830, 0
      %v838 = vunpack.c.l.b16 %v825
      %v839 = vunpack.c.l.b16 %v826
      %v840 = vunpack.c.l.b16 %v827
      %v841 = vunpack.c.l.b16 %v828
      %v842 = vpack.c.b16 %v839, %v838
      %v843 = vpack.c.b16 %v841, %v840
      %v847 = vsel %vm482, %v816, 0
      %v850 = vsel %vm482, %v817, 0
      %v853 = vsel %vm482, %v818, 0
      %v856 = vsel %vm482, %v819, 0
      %v859 = vsel %vm482, %v820, 0
      %v862 = vsel %vm482, %v821, 0
      %v865 = vsel %vm482, %v822, 0
      %v868 = vsel %vm482, %v823, 0
      %870 = vmatpush.bf16.msra.mxu0 0
      %871 = vmatpush.bf16.msra.mxu0 0
      %872 = vmatpush.bf16.msra.mxu0 0
      %873 = vmatpush.bf16.msra.mxu0 0
      %874 = vmatpush.bf16.msra.mxu0 0
      %875 = vmatpush.bf16.msra.mxu0 0
      %876 = vmatpush.bf16.msra.mxu0 %v843
      %877 = vmatpush.bf16.msra.mxu0 %v842
      %878 = vmatmul.bf16.gmra.mxu0 %v847
      %v879 = vpop.f32.mrf.mxu0
      %v880 = vadd.f32 %v832, %v879
      %v881 = vpop.f32.mrf.mxu0
      %v882 = vadd.f32 %v832, %v881
      %883 = vmatmul.bf16.gmra.mxu0 %v850
      %v884 = vpop.f32.mrf.mxu0
      %v885 = vadd.f32 %v832, %v884
      %v886 = vpop.f32.mrf.mxu0
      %v887 = vadd.f32 %v832, %v886
      %888 = vmatmul.bf16.gmra.mxu0 %v853
      %v889 = vpop.f32.mrf.mxu0
      %v890 = vadd.f32 %v832, %v889
      %v891 = vpop.f32.mrf.mxu0
      %v892 = vadd.f32 %v832, %v891
      %893 = vmatmul.bf16.gmra.mxu0 %v856
      %v894 = vpop.f32.mrf.mxu0
      %v895 = vadd.f32 %v832, %v894
      %v896 = vpop.f32.mrf.mxu0
      %v897 = vadd.f32 %v832, %v896
      %898 = vmatmul.bf16.gmra.mxu0 %v859
      %v899 = vpop.f32.mrf.mxu0
      %v900 = vadd.f32 %v832, %v899
      %v901 = vpop.f32.mrf.mxu0
      %v902 = vadd.f32 %v832, %v901
      %903 = vmatmul.bf16.gmra.mxu0 %v862
      %v904 = vpop.f32.mrf.mxu0
      %v905 = vadd.f32 %v832, %v904
      %v906 = vpop.f32.mrf.mxu0
      %v907 = vadd.f32 %v832, %v906
      %908 = vmatmul.bf16.gmra.mxu0 %v865
      %v909 = vpop.f32.mrf.mxu0
      %v910 = vadd.f32 %v832, %v909
      %v911 = vpop.f32.mrf.mxu0
      %v912 = vadd.f32 %v832, %v911
      %913 = vmatmul.bf16.gmra.mxu0 %v868
      %v914 = vpop.f32.mrf.mxu0
      %v915 = vadd.f32 %v832, %v914
      %v916 = vpop.f32.mrf.mxu0
      %v917 = vadd.f32 %v832, %v916
      %918 = vdwg.mxu0
      %v919 = vpack.c.bf16 %v880, %v880
      %v920 = vpack.c.bf16 %v882, %v882
      %v921 = vpack.c.bf16 %v885, %v885
      %v922 = vpack.c.bf16 %v887, %v887
      %v923 = vpack.c.bf16 %v890, %v890
      %v924 = vpack.c.bf16 %v892, %v892
      %v925 = vpack.c.bf16 %v895, %v895
      %v926 = vpack.c.bf16 %v897, %v897
      %v927 = vpack.c.bf16 %v900, %v900
      %v928 = vpack.c.bf16 %v902, %v902
      %v929 = vpack.c.bf16 %v905, %v905
      %v930 = vpack.c.bf16 %v907, %v907
      %v931 = vpack.c.bf16 %v910, %v910
      %v932 = vpack.c.bf16 %v912, %v912
      %v933 = vpack.c.bf16 %v915, %v915
      %v934 = vpack.c.bf16 %v917, %v917
      %935 = vst.msk [vmem:[%s425] sm:$0xf] %vm572, %v919
      %936 = vst.msk [vmem:[%s425 + $0x4] sm:$0xf] %vm572, %v920
      %937 = vst.msk [vmem:[%s425 + $0x8] sm:$0xf] %vm572, %v921
      %938 = vst.msk [vmem:[%s425 + $0xc] sm:$0xf] %vm572, %v922
      %939 = vst.msk [vmem:[%s425 + $0x10] sm:$0xf] %vm572, %v923
      %940 = vst.msk [vmem:[%s425 + $0x14] sm:$0xf] %vm572, %v924
      %941 = vst.msk [vmem:[%s425 + $0x18] sm:$0xf] %vm572, %v925
      %942 = vst.msk [vmem:[%s425 + $0x1c] sm:$0xf] %vm572, %v926
      %943 = vst.msk [vmem:[%s425 + $0x20] sm:$0xf] %vm572, %v927
      %944 = vst.msk [vmem:[%s425 + $0x24] sm:$0xf] %vm572, %v928
      %945 = vst.msk [vmem:[%s425 + $0x28] sm:$0xf] %vm572, %v929
      %946 = vst.msk [vmem:[%s425 + $0x2c] sm:$0xf] %vm572, %v930
      %947 = vst.msk [vmem:[%s425 + $0x30] sm:$0xf] %vm572, %v931
      %948 = vst.msk [vmem:[%s425 + $0x34] sm:$0xf] %vm572, %v932
      %949 = vst.msk [vmem:[%s425 + $0x38] sm:$0xf] %vm572, %v933
      %950 = vst.msk [vmem:[%s425 + $0x3c] sm:$0xf] %vm572, %v934
      %967 = vrot.lane.b32.xlu0 %v919, 120
      %v968 = vpop.permute.xlu0 %967
      %969 = vrot.lane.b32.xlu0 %v920, 120
      %v970 = vpop.permute.xlu0 %969
      %971 = vrot.lane.b32.xlu0 %v921, 120
      %v972 = vpop.permute.xlu0 %971
      %973 = vrot.lane.b32.xlu0 %v922, 120
      %v974 = vpop.permute.xlu0 %973
      %975 = vrot.lane.b32.xlu0 %v923, 120
      %v976 = vpop.permute.xlu0 %975
      %977 = vrot.lane.b32.xlu0 %v924, 120
      %v978 = vpop.permute.xlu0 %977
      %979 = vrot.lane.b32.xlu0 %v925, 120
      %v980 = vpop.permute.xlu0 %979
      %981 = vrot.lane.b32.xlu0 %v926, 120
      %v982 = vpop.permute.xlu0 %981
      %983 = vrot.lane.b32.xlu0 %v927, 120
      %v984 = vpop.permute.xlu0 %983
      %985 = vrot.lane.b32.xlu0 %v928, 120
      %v986 = vpop.permute.xlu0 %985
      %987 = vrot.lane.b32.xlu0 %v929, 120
      %v988 = vpop.permute.xlu0 %987
      %989 = vrot.lane.b32.xlu0 %v930, 120
      %v990 = vpop.permute.xlu0 %989
      %991 = vrot.lane.b32.xlu0 %v931, 120
      %v992 = vpop.permute.xlu0 %991
      %993 = vrot.lane.b32.xlu0 %v932, 120
      %v994 = vpop.permute.xlu0 %993
      %995 = vrot.lane.b32.xlu0 %v933, 120
      %v996 = vpop.permute.xlu0 %995
      %997 = vrot.lane.b32.xlu0 %v934, 120
      %v998 = vpop.permute.xlu0 %997
      %s1015 = scalar_lea.vmem %s425, 64
      %1016 = vst.msk [vmem:[%s1015] sm:$0xf] %vm572, %v968
      %1017 = vst.msk [vmem:[%s1015 + $0x4] sm:$0xf] %vm572, %v970
      %1018 = vst.msk [vmem:[%s1015 + $0x8] sm:$0xf] %vm572, %v972
      %1019 = vst.msk [vmem:[%s1015 + $0xc] sm:$0xf] %vm572, %v974
      %1020 = vst.msk [vmem:[%s1015 + $0x10] sm:$0xf] %vm572, %v976
      %1021 = vst.msk [vmem:[%s1015 + $0x14] sm:$0xf] %vm572, %v978
      %1022 = vst.msk [vmem:[%s1015 + $0x18] sm:$0xf] %vm572, %v980
      %1023 = vst.msk [vmem:[%s1015 + $0x1c] sm:$0xf] %vm572, %v982
      %1024 = vst.msk [vmem:[%s1015 + $0x20] sm:$0xf] %vm572, %v984
      %1025 = vst.msk [vmem:[%s1015 + $0x24] sm:$0xf] %vm572, %v986
      %1026 = vst.msk [vmem:[%s1015 + $0x28] sm:$0xf] %vm572, %v988
      %1027 = vst.msk [vmem:[%s1015 + $0x2c] sm:$0xf] %vm572, %v990
      %1028 = vst.msk [vmem:[%s1015 + $0x30] sm:$0xf] %vm572, %v992
      %1029 = vst.msk [vmem:[%s1015 + $0x34] sm:$0xf] %vm572, %v994
      %1030 = vst.msk [vmem:[%s1015 + $0x38] sm:$0xf] %vm572, %v996
      %1031 = vst.msk [vmem:[%s1015 + $0x3c] sm:$0xf] %vm572, %v998
      %1032 = vrot.lane.b32.xlu0 %v919, 112
      %v1033 = vpop.permute.xlu0 %1032
      %1034 = vrot.lane.b32.xlu0 %v920, 112
      %v1035 = vpop.permute.xlu0 %1034
      %1036 = vrot.lane.b32.xlu0 %v921, 112
      %v1037 = vpop.permute.xlu0 %1036
      %1038 = vrot.lane.b32.xlu0 %v922, 112
      %v1039 = vpop.permute.xlu0 %1038
      %1040 = vrot.lane.b32.xlu0 %v923, 112
      %v1041 = vpop.permute.xlu0 %1040
      %1042 = vrot.lane.b32.xlu0 %v924, 112
      %v1043 = vpop.permute.xlu0 %1042
      %1044 = vrot.lane.b32.xlu0 %v925, 112
      %v1045 = vpop.permute.xlu0 %1044
      %1046 = vrot.lane.b32.xlu0 %v926, 112
      %v1047 = vpop.permute.xlu0 %1046
      %1048 = vrot.lane.b32.xlu0 %v927, 112
      %v1049 = vpop.permute.xlu0 %1048
      %1050 = vrot.lane.b32.xlu0 %v928, 112
      %v1051 = vpop.permute.xlu0 %1050
      %1052 = vrot.lane.b32.xlu0 %v929, 112
      %v1053 = vpop.permute.xlu0 %1052
      %1054 = vrot.lane.b32.xlu0 %v930, 112
      %v1055 = vpop.permute.xlu0 %1054
      %1056 = vrot.lane.b32.xlu0 %v931, 112
      %v1057 = vpop.permute.xlu0 %1056
      %1058 = vrot.lane.b32.xlu0 %v932, 112
      %v1059 = vpop.permute.xlu0 %1058
      %1060 = vrot.lane.b32.xlu0 %v933, 112
      %v1061 = vpop.permute.xlu0 %1060
      %1062 = vrot.lane.b32.xlu0 %v934, 112
      %v1063 = vpop.permute.xlu0 %1062
      %s1080 = scalar_lea.vmem %s425, 128
      %1081 = vst.msk [vmem:[%s1080] sm:$0xf] %vm572, %v1033
      %1082 = vst.msk [vmem:[%s1080 + $0x4] sm:$0xf] %vm572, %v1035
      %1083 = vst.msk [vmem:[%s1080 + $0x8] sm:$0xf] %vm572, %v1037
      %1084 = vst.msk [vmem:[%s1080 + $0xc] sm:$0xf] %vm572, %v1039
      %1085 = vst.msk [vmem:[%s1080 + $0x10] sm:$0xf] %vm572, %v1041
      %1086 = vst.msk [vmem:[%s1080 + $0x14] sm:$0xf] %vm572, %v1043
      %1087 = vst.msk [vmem:[%s1080 + $0x18] sm:$0xf] %vm572, %v1045
      %1088 = vst.msk [vmem:[%s1080 + $0x1c] sm:$0xf] %vm572, %v1047
      %1089 = vst.msk [vmem:[%s1080 + $0x20] sm:$0xf] %vm572, %v1049
      %1090 = vst.msk [vmem:[%s1080 + $0x24] sm:$0xf] %vm572, %v1051
      %1091 = vst.msk [vmem:[%s1080 + $0x28] sm:$0xf] %vm572, %v1053
      %1092 = vst.msk [vmem:[%s1080 + $0x2c] sm:$0xf] %vm572, %v1055
      %1093 = vst.msk [vmem:[%s1080 + $0x30] sm:$0xf] %vm572, %v1057
      %1094 = vst.msk [vmem:[%s1080 + $0x34] sm:$0xf] %vm572, %v1059
      %1095 = vst.msk [vmem:[%s1080 + $0x38] sm:$0xf] %vm572, %v1061
      %1096 = vst.msk [vmem:[%s1080 + $0x3c] sm:$0xf] %vm572, %v1063
      %1097 = vrot.lane.b32.xlu0 %v919, 104
      %v1098 = vpop.permute.xlu0 %1097
      %1099 = vrot.lane.b32.xlu0 %v920, 104
      %v1100 = vpop.permute.xlu0 %1099
      %1101 = vrot.lane.b32.xlu0 %v921, 104
      %v1102 = vpop.permute.xlu0 %1101
      %1103 = vrot.lane.b32.xlu0 %v922, 104
      %v1104 = vpop.permute.xlu0 %1103
      %1105 = vrot.lane.b32.xlu0 %v923, 104
      %v1106 = vpop.permute.xlu0 %1105
      %1107 = vrot.lane.b32.xlu0 %v924, 104
      %v1108 = vpop.permute.xlu0 %1107
      %1109 = vrot.lane.b32.xlu0 %v925, 104
      %v1110 = vpop.permute.xlu0 %1109
      %1111 = vrot.lane.b32.xlu0 %v926, 104
      %v1112 = vpop.permute.xlu0 %1111
      %1113 = vrot.lane.b32.xlu0 %v927, 104
      %v1114 = vpop.permute.xlu0 %1113
      %1115 = vrot.lane.b32.xlu0 %v928, 104
      %v1116 = vpop.permute.xlu0 %1115
      %1117 = vrot.lane.b32.xlu0 %v929, 104
      %v1118 = vpop.permute.xlu0 %1117
      %1119 = vrot.lane.b32.xlu0 %v930, 104
      %v1120 = vpop.permute.xlu0 %1119
      %1121 = vrot.lane.b32.xlu0 %v931, 104
      %v1122 = vpop.permute.xlu0 %1121
      %1123 = vrot.lane.b32.xlu0 %v932, 104
      %v1124 = vpop.permute.xlu0 %1123
      %1125 = vrot.lane.b32.xlu0 %v933, 104
      %v1126 = vpop.permute.xlu0 %1125
      %1127 = vrot.lane.b32.xlu0 %v934, 104
      %v1128 = vpop.permute.xlu0 %1127
      %s1145 = scalar_lea.vmem %s425, 192
      %1146 = vst.msk [vmem:[%s1145] sm:$0xf] %vm572, %v1098
      %1147 = vst.msk [vmem:[%s1145 + $0x4] sm:$0xf] %vm572, %v1100
      %1148 = vst.msk [vmem:[%s1145 + $0x8] sm:$0xf] %vm572, %v1102
      %1149 = vst.msk [vmem:[%s1145 + $0xc] sm:$0xf] %vm572, %v1104
      %1150 = vst.msk [vmem:[%s1145 + $0x10] sm:$0xf] %vm572, %v1106
      %1151 = vst.msk [vmem:[%s1145 + $0x14] sm:$0xf] %vm572, %v1108
      %1152 = vst.msk [vmem:[%s1145 + $0x18] sm:$0xf] %vm572, %v1110
      %1153 = vst.msk [vmem:[%s1145 + $0x1c] sm:$0xf] %vm572, %v1112
      %1154 = vst.msk [vmem:[%s1145 + $0x20] sm:$0xf] %vm572, %v1114
      %1155 = vst.msk [vmem:[%s1145 + $0x24] sm:$0xf] %vm572, %v1116
      %1156 = vst.msk [vmem:[%s1145 + $0x28] sm:$0xf] %vm572, %v1118
      %1157 = vst.msk [vmem:[%s1145 + $0x2c] sm:$0xf] %vm572, %v1120
      %1158 = vst.msk [vmem:[%s1145 + $0x30] sm:$0xf] %vm572, %v1122
      %1159 = vst.msk [vmem:[%s1145 + $0x34] sm:$0xf] %vm572, %v1124
      %1160 = vst.msk [vmem:[%s1145 + $0x38] sm:$0xf] %vm572, %v1126
      %1161 = vst.msk [vmem:[%s1145 + $0x3c] sm:$0xf] %vm572, %v1128
      %v1162 = vld [vmem:[%s405] sm:$0xff]
      %v1163 = vld [vmem:[%s405 + $0x8] sm:$0xff]
      %v1164 = vld [vmem:[%s405 + $0x10] sm:$0xff]
      %v1165 = vld [vmem:[%s405 + $0x18] sm:$0xff]
      %v1166 = vld [vmem:[%s405 + $0x20] sm:$0xff]
      %v1167 = vld [vmem:[%s405 + $0x28] sm:$0xff]
      %v1168 = vld [vmem:[%s405 + $0x30] sm:$0xff]
      %v1169 = vld [vmem:[%s405 + $0x38] sm:$0xff]
      %v1170 = vld [vmem:[%s405 + $0x40] sm:$0xff]
      %v1171 = vld [vmem:[%s405 + $0x48] sm:$0xff]
      %v1172 = vld [vmem:[%s405 + $0x50] sm:$0xff]
      %v1173 = vld [vmem:[%s405 + $0x58] sm:$0xff]
      %v1174 = vld [vmem:[%s405 + $0x60] sm:$0xff]
      %v1175 = vld [vmem:[%s405 + $0x68] sm:$0xff]
      %v1176 = vld [vmem:[%s405 + $0x70] sm:$0xff]
      %v1177 = vld [vmem:[%s405 + $0x78] sm:$0xff]
      %v1178 = vpack.c.bf16 %v1163, %v1162
      %v1179 = vpack.c.bf16 %v1165, %v1164
      %v1180 = vpack.c.bf16 %v1167, %v1166
      %v1181 = vpack.c.bf16 %v1169, %v1168
      %v1182 = vpack.c.bf16 %v1171, %v1170
      %v1183 = vpack.c.bf16 %v1173, %v1172
      %v1184 = vpack.c.bf16 %v1175, %v1174
      %v1185 = vpack.c.bf16 %v1177, %v1176
      %s1186 = scalar_lea.vmem %s3, 32
      %v1187 = vld [vmem:[%s1186] sm:$0xf]
      %v1188 = vld [vmem:[%s1186 + $0x4] sm:$0xf]
      %v1189 = vld [vmem:[%s1186 + $0x8] sm:$0xf]
      %v1190 = vld [vmem:[%s1186 + $0xc] sm:$0xf]
      %s1191 = scalar_lea.vmem %s4, 2
      %v1192 = vld [vmem:[%s1191] sm:$0x1]
      %v1194 = vperm.slane %v1192, 0
      %v1200 = vunpack.c.l.b16 %v1187
      %v1201 = vunpack.c.l.b16 %v1188
      %v1202 = vunpack.c.l.b16 %v1189
      %v1203 = vunpack.c.l.b16 %v1190
      %v1204 = vpack.c.b16 %v1201, %v1200
      %v1205 = vpack.c.b16 %v1203, %v1202
      %v1209 = vsel %vm482, %v1178, 0
      %v1212 = vsel %vm482, %v1179, 0
      %v1215 = vsel %vm482, %v1180, 0
      %v1218 = vsel %vm482, %v1181, 0
      %v1221 = vsel %vm482, %v1182, 0
      %v1224 = vsel %vm482, %v1183, 0
      %v1227 = vsel %vm482, %v1184, 0
      %v1230 = vsel %vm482, %v1185, 0
      %1232 = vmatpush.bf16.msra.mxu0 0
      %1233 = vmatpush.bf16.msra.mxu0 0
      %1234 = vmatpush.bf16.msra.mxu0 0
      %1235 = vmatpush.bf16.msra.mxu0 0
      %1236 = vmatpush.bf16.msra.mxu0 0
      %1237 = vmatpush.bf16.msra.mxu0 0
      %1238 = vmatpush.bf16.msra.mxu0 %v1205
      %1239 = vmatpush.bf16.msra.mxu0 %v1204
      %1240 = vmatmul.bf16.gmra.mxu0 %v1209
      %v1241 = vpop.f32.mrf.mxu0
      %v1242 = vadd.f32 %v1194, %v1241
      %v1243 = vpop.f32.mrf.mxu0
      %v1244 = vadd.f32 %v1194, %v1243
      %1245 = vmatmul.bf16.gmra.mxu0 %v1212
      %v1246 = vpop.f32.mrf.mxu0
      %v1247 = vadd.f32 %v1194, %v1246
      %v1248 = vpop.f32.mrf.mxu0
      %v1249 = vadd.f32 %v1194, %v1248
      %1250 = vmatmul.bf16.gmra.mxu0 %v1215
      %v1251 = vpop.f32.mrf.mxu0
      %v1252 = vadd.f32 %v1194, %v1251
      %v1253 = vpop.f32.mrf.mxu0
      %v1254 = vadd.f32 %v1194, %v1253
      %1255 = vmatmul.bf16.gmra.mxu0 %v1218
      %v1256 = vpop.f32.mrf.mxu0
      %v1257 = vadd.f32 %v1194, %v1256
      %v1258 = vpop.f32.mrf.mxu0
      %v1259 = vadd.f32 %v1194, %v1258
      %1260 = vmatmul.bf16.gmra.mxu0 %v1221
      %v1261 = vpop.f32.mrf.mxu0
      %v1262 = vadd.f32 %v1194, %v1261
      %v1263 = vpop.f32.mrf.mxu0
      %v1264 = vadd.f32 %v1194, %v1263
      %1265 = vmatmul.bf16.gmra.mxu0 %v1224
      %v1266 = vpop.f32.mrf.mxu0
      %v1267 = vadd.f32 %v1194, %v1266
      %v1268 = vpop.f32.mrf.mxu0
      %v1269 = vadd.f32 %v1194, %v1268
      %1270 = vmatmul.bf16.gmra.mxu0 %v1227
      %v1271 = vpop.f32.mrf.mxu0
      %v1272 = vadd.f32 %v1194, %v1271
      %v1273 = vpop.f32.mrf.mxu0
      %v1274 = vadd.f32 %v1194, %v1273
      %1275 = vmatmul.bf16.gmra.mxu0 %v1230
      %v1276 = vpop.f32.mrf.mxu0
      %v1277 = vadd.f32 %v1194, %v1276
      %v1278 = vpop.f32.mrf.mxu0
      %v1279 = vadd.f32 %v1194, %v1278
      %1280 = vdwg.mxu0
      %v1281 = vpack.c.bf16 %v1242, %v1242
      %v1282 = vpack.c.bf16 %v1244, %v1244
      %v1283 = vpack.c.bf16 %v1247, %v1247
      %v1284 = vpack.c.bf16 %v1249, %v1249
      %v1285 = vpack.c.bf16 %v1252, %v1252
      %v1286 = vpack.c.bf16 %v1254, %v1254
      %v1287 = vpack.c.bf16 %v1257, %v1257
      %v1288 = vpack.c.bf16 %v1259, %v1259
      %v1289 = vpack.c.bf16 %v1262, %v1262
      %v1290 = vpack.c.bf16 %v1264, %v1264
      %v1291 = vpack.c.bf16 %v1267, %v1267
      %v1292 = vpack.c.bf16 %v1269, %v1269
      %v1293 = vpack.c.bf16 %v1272, %v1272
      %v1294 = vpack.c.bf16 %v1274, %v1274
      %v1295 = vpack.c.bf16 %v1277, %v1277
      %v1296 = vpack.c.bf16 %v1279, %v1279
      %1297 = vst.msk [vmem:[%s435] sm:$0xf] %vm572, %v1281
      %1298 = vst.msk [vmem:[%s435 + $0x4] sm:$0xf] %vm572, %v1282
      %1299 = vst.msk [vmem:[%s435 + $0x8] sm:$0xf] %vm572, %v1283
      %1300 = vst.msk [vmem:[%s435 + $0xc] sm:$0xf] %vm572, %v1284
      %1301 = vst.msk [vmem:[%s435 + $0x10] sm:$0xf] %vm572, %v1285
      %1302 = vst.msk [vmem:[%s435 + $0x14] sm:$0xf] %vm572, %v1286
      %1303 = vst.msk [vmem:[%s435 + $0x18] sm:$0xf] %vm572, %v1287
      %1304 = vst.msk [vmem:[%s435 + $0x1c] sm:$0xf] %vm572, %v1288
      %1305 = vst.msk [vmem:[%s435 + $0x20] sm:$0xf] %vm572, %v1289
      %1306 = vst.msk [vmem:[%s435 + $0x24] sm:$0xf] %vm572, %v1290
      %1307 = vst.msk [vmem:[%s435 + $0x28] sm:$0xf] %vm572, %v1291
      %1308 = vst.msk [vmem:[%s435 + $0x2c] sm:$0xf] %vm572, %v1292
      %1309 = vst.msk [vmem:[%s435 + $0x30] sm:$0xf] %vm572, %v1293
      %1310 = vst.msk [vmem:[%s435 + $0x34] sm:$0xf] %vm572, %v1294
      %1311 = vst.msk [vmem:[%s435 + $0x38] sm:$0xf] %vm572, %v1295
      %1312 = vst.msk [vmem:[%s435 + $0x3c] sm:$0xf] %vm572, %v1296
      %1329 = vrot.lane.b32.xlu0 %v1281, 120
      %v1330 = vpop.permute.xlu0 %1329
      %1331 = vrot.lane.b32.xlu0 %v1282, 120
      %v1332 = vpop.permute.xlu0 %1331
      %1333 = vrot.lane.b32.xlu0 %v1283, 120
      %v1334 = vpop.permute.xlu0 %1333
      %1335 = vrot.lane.b32.xlu0 %v1284, 120
      %v1336 = vpop.permute.xlu0 %1335
      %1337 = vrot.lane.b32.xlu0 %v1285, 120
      %v1338 = vpop.permute.xlu0 %1337
      %1339 = vrot.lane.b32.xlu0 %v1286, 120
      %v1340 = vpop.permute.xlu0 %1339
      %1341 = vrot.lane.b32.xlu0 %v1287, 120
      %v1342 = vpop.permute.xlu0 %1341
      %1343 = vrot.lane.b32.xlu0 %v1288, 120
      %v1344 = vpop.permute.xlu0 %1343
      %1345 = vrot.lane.b32.xlu0 %v1289, 120
      %v1346 = vpop.permute.xlu0 %1345
      %1347 = vrot.lane.b32.xlu0 %v1290, 120
      %v1348 = vpop.permute.xlu0 %1347
      %1349 = vrot.lane.b32.xlu0 %v1291, 120
      %v1350 = vpop.permute.xlu0 %1349
      %1351 = vrot.lane.b32.xlu0 %v1292, 120
      %v1352 = vpop.permute.xlu0 %1351
      %1353 = vrot.lane.b32.xlu0 %v1293, 120
      %v1354 = vpop.permute.xlu0 %1353
      %1355 = vrot.lane.b32.xlu0 %v1294, 120
      %v1356 = vpop.permute.xlu0 %1355
      %1357 = vrot.lane.b32.xlu0 %v1295, 120
      %v1358 = vpop.permute.xlu0 %1357
      %1359 = vrot.lane.b32.xlu0 %v1296, 120
      %v1360 = vpop.permute.xlu0 %1359
      %s1377 = scalar_lea.vmem %s435, 64
      %1378 = vst.msk [vmem:[%s1377] sm:$0xf] %vm572, %v1330
      %1379 = vst.msk [vmem:[%s1377 + $0x4] sm:$0xf] %vm572, %v1332
      %1380 = vst.msk [vmem:[%s1377 + $0x8] sm:$0xf] %vm572, %v1334
      %1381 = vst.msk [vmem:[%s1377 + $0xc] sm:$0xf] %vm572, %v1336
      %1382 = vst.msk [vmem:[%s1377 + $0x10] sm:$0xf] %vm572, %v1338
      %1383 = vst.msk [vmem:[%s1377 + $0x14] sm:$0xf] %vm572, %v1340
      %1384 = vst.msk [vmem:[%s1377 + $0x18] sm:$0xf] %vm572, %v1342
      %1385 = vst.msk [vmem:[%s1377 + $0x1c] sm:$0xf] %vm572, %v1344
      %1386 = vst.msk [vmem:[%s1377 + $0x20] sm:$0xf] %vm572, %v1346
      %1387 = vst.msk [vmem:[%s1377 + $0x24] sm:$0xf] %vm572, %v1348
      %1388 = vst.msk [vmem:[%s1377 + $0x28] sm:$0xf] %vm572, %v1350
      %1389 = vst.msk [vmem:[%s1377 + $0x2c] sm:$0xf] %vm572, %v1352
      %1390 = vst.msk [vmem:[%s1377 + $0x30] sm:$0xf] %vm572, %v1354
      %1391 = vst.msk [vmem:[%s1377 + $0x34] sm:$0xf] %vm572, %v1356
      %1392 = vst.msk [vmem:[%s1377 + $0x38] sm:$0xf] %vm572, %v1358
      %1393 = vst.msk [vmem:[%s1377 + $0x3c] sm:$0xf] %vm572, %v1360
      %1394 = vrot.lane.b32.xlu0 %v1281, 112
      %v1395 = vpop.permute.xlu0 %1394
      %1396 = vrot.lane.b32.xlu0 %v1282, 112
      %v1397 = vpop.permute.xlu0 %1396
      %1398 = vrot.lane.b32.xlu0 %v1283, 112
      %v1399 = vpop.permute.xlu0 %1398
      %1400 = vrot.lane.b32.xlu0 %v1284, 112
      %v1401 = vpop.permute.xlu0 %1400
      %1402 = vrot.lane.b32.xlu0 %v1285, 112
      %v1403 = vpop.permute.xlu0 %1402
      %1404 = vrot.lane.b32.xlu0 %v1286, 112
      %v1405 = vpop.permute.xlu0 %1404
      %1406 = vrot.lane.b32.xlu0 %v1287, 112
      %v1407 = vpop.permute.xlu0 %1406
      %1408 = vrot.lane.b32.xlu0 %v1288, 112
      %v1409 = vpop.permute.xlu0 %1408
      %1410 = vrot.lane.b32.xlu0 %v1289, 112
      %v1411 = vpop.permute.xlu0 %1410
      %1412 = vrot.lane.b32.xlu0 %v1290, 112
      %v1413 = vpop.permute.xlu0 %1412
      %1414 = vrot.lane.b32.xlu0 %v1291, 112
      %v1415 = vpop.permute.xlu0 %1414
      %1416 = vrot.lane.b32.xlu0 %v1292, 112
      %v1417 = vpop.permute.xlu0 %1416
      %1418 = vrot.lane.b32.xlu0 %v1293, 112
      %v1419 = vpop.permute.xlu0 %1418
      %1420 = vrot.lane.b32.xlu0 %v1294, 112
      %v1421 = vpop.permute.xlu0 %1420
      %1422 = vrot.lane.b32.xlu0 %v1295, 112
      %v1423 = vpop.permute.xlu0 %1422
      %1424 = vrot.lane.b32.xlu0 %v1296, 112
      %v1425 = vpop.permute.xlu0 %1424
      %s1442 = scalar_lea.vmem %s435, 128
      %1443 = vst.msk [vmem:[%s1442] sm:$0xf] %vm572, %v1395
      %1444 = vst.msk [vmem:[%s1442 + $0x4] sm:$0xf] %vm572, %v1397
      %1445 = vst.msk [vmem:[%s1442 + $0x8] sm:$0xf] %vm572, %v1399
      %1446 = vst.msk [vmem:[%s1442 + $0xc] sm:$0xf] %vm572, %v1401
      %1447 = vst.msk [vmem:[%s1442 + $0x10] sm:$0xf] %vm572, %v1403
      %1448 = vst.msk [vmem:[%s1442 + $0x14] sm:$0xf] %vm572, %v1405
      %1449 = vst.msk [vmem:[%s1442 + $0x18] sm:$0xf] %vm572, %v1407
      %1450 = vst.msk [vmem:[%s1442 + $0x1c] sm:$0xf] %vm572, %v1409
      %1451 = vst.msk [vmem:[%s1442 + $0x20] sm:$0xf] %vm572, %v1411
      %1452 = vst.msk [vmem:[%s1442 + $0x24] sm:$0xf] %vm572, %v1413
      %1453 = vst.msk [vmem:[%s1442 + $0x28] sm:$0xf] %vm572, %v1415
      %1454 = vst.msk [vmem:[%s1442 + $0x2c] sm:$0xf] %vm572, %v1417
      %1455 = vst.msk [vmem:[%s1442 + $0x30] sm:$0xf] %vm572, %v1419
      %1456 = vst.msk [vmem:[%s1442 + $0x34] sm:$0xf] %vm572, %v1421
      %1457 = vst.msk [vmem:[%s1442 + $0x38] sm:$0xf] %vm572, %v1423
      %1458 = vst.msk [vmem:[%s1442 + $0x3c] sm:$0xf] %vm572, %v1425
      %1459 = vrot.lane.b32.xlu0 %v1281, 104
      %v1460 = vpop.permute.xlu0 %1459
      %1461 = vrot.lane.b32.xlu0 %v1282, 104
      %v1462 = vpop.permute.xlu0 %1461
      %1463 = vrot.lane.b32.xlu0 %v1283, 104
      %v1464 = vpop.permute.xlu0 %1463
      %1465 = vrot.lane.b32.xlu0 %v1284, 104
      %v1466 = vpop.permute.xlu0 %1465
      %1467 = vrot.lane.b32.xlu0 %v1285, 104
      %v1468 = vpop.permute.xlu0 %1467
      %1469 = vrot.lane.b32.xlu0 %v1286, 104
      %v1470 = vpop.permute.xlu0 %1469
      %1471 = vrot.lane.b32.xlu0 %v1287, 104
      %v1472 = vpop.permute.xlu0 %1471
      %1473 = vrot.lane.b32.xlu0 %v1288, 104
      %v1474 = vpop.permute.xlu0 %1473
      %1475 = vrot.lane.b32.xlu0 %v1289, 104
      %v1476 = vpop.permute.xlu0 %1475
      %1477 = vrot.lane.b32.xlu0 %v1290, 104
      %v1478 = vpop.permute.xlu0 %1477
      %1479 = vrot.lane.b32.xlu0 %v1291, 104
      %v1480 = vpop.permute.xlu0 %1479
      %1481 = vrot.lane.b32.xlu0 %v1292, 104
      %v1482 = vpop.permute.xlu0 %1481
      %1483 = vrot.lane.b32.xlu0 %v1293, 104
      %v1484 = vpop.permute.xlu0 %1483
      %1485 = vrot.lane.b32.xlu0 %v1294, 104
      %v1486 = vpop.permute.xlu0 %1485
      %1487 = vrot.lane.b32.xlu0 %v1295, 104
      %v1488 = vpop.permute.xlu0 %1487
      %1489 = vrot.lane.b32.xlu0 %v1296, 104
      %v1490 = vpop.permute.xlu0 %1489
      %s1507 = scalar_lea.vmem %s435, 192
      %1508 = vst.msk [vmem:[%s1507] sm:$0xf] %vm572, %v1460
      %1509 = vst.msk [vmem:[%s1507 + $0x4] sm:$0xf] %vm572, %v1462
      %1510 = vst.msk [vmem:[%s1507 + $0x8] sm:$0xf] %vm572, %v1464
      %1511 = vst.msk [vmem:[%s1507 + $0xc] sm:$0xf] %vm572, %v1466
      %1512 = vst.msk [vmem:[%s1507 + $0x10] sm:$0xf] %vm572, %v1468
      %1513 = vst.msk [vmem:[%s1507 + $0x14] sm:$0xf] %vm572, %v1470
      %1514 = vst.msk [vmem:[%s1507 + $0x18] sm:$0xf] %vm572, %v1472
      %1515 = vst.msk [vmem:[%s1507 + $0x1c] sm:$0xf] %vm572, %v1474
      %1516 = vst.msk [vmem:[%s1507 + $0x20] sm:$0xf] %vm572, %v1476
      %1517 = vst.msk [vmem:[%s1507 + $0x24] sm:$0xf] %vm572, %v1478
      %1518 = vst.msk [vmem:[%s1507 + $0x28] sm:$0xf] %vm572, %v1480
      %1519 = vst.msk [vmem:[%s1507 + $0x2c] sm:$0xf] %vm572, %v1482
      %1520 = vst.msk [vmem:[%s1507 + $0x30] sm:$0xf] %vm572, %v1484
      %1521 = vst.msk [vmem:[%s1507 + $0x34] sm:$0xf] %vm572, %v1486
      %1522 = vst.msk [vmem:[%s1507 + $0x38] sm:$0xf] %vm572, %v1488
      %1523 = vst.msk [vmem:[%s1507 + $0x3c] sm:$0xf] %vm572, %v1490
      %s1524 = smul.u32 16, %s24
      %p1525 = scmp.lt.s32.totalorder %s23, 1
      %s1526 = scalar_select %p1525, %s23, 1
      %p1527 = scmp.lt.s32.totalorder %s1524, 15
      %s1528 = scalar_select %p1527, %s1524, 15
      %s1529 = smul.addr %s1526, 64
      %s1530 = sadd.s32 %s1528, %s1529
      %s1531 = smul.addr %s1530, 4
      %s1532 = scalar_lea.vmem %s5, %s1531
      %s1533 = smul.u32 16, %s24
      %p1534 = scmp.lt.s32.totalorder %s23, 1
      %s1535 = scalar_select %p1534, %s23, 1
      %p1536 = scmp.lt.s32.totalorder %s1533, 15
      %s1537 = scalar_select %p1536, %s1533, 15
      %s1538 = smul.addr %s1535, 64
      %s1539 = sadd.s32 %s1537, %s1538
      %s1540 = smul.addr %s1539, 4
      %s1541 = scalar_lea.vmem %s6, %s1540
      %s1542 = smul.u32 16, %s24
      %p1543 = scmp.lt.s32.totalorder %s23, 1
      %s1544 = scalar_select %p1543, %s23, 1
      %p1545 = scmp.lt.s32.totalorder %s1542, 15
      %s1546 = scalar_select %p1545, %s1542, 15
      %s1547 = smul.addr %s1544, 64
      %s1548 = sadd.s32 %s1546, %s1547
      %s1549 = smul.addr %s1548, 4
      %s1550 = scalar_lea.vmem %s7, %s1549
      // Predicated region
      $region41: #{tpu_custom_call.1} parent=39 // pred_check
        %p1551 = pneg %p177
      $region42: #{tpu_custom_call.1} parent=39 // pred_check_branch
        %1553 = sbr.rel (%p1551) target = $region44
      $region43: #{tpu_custom_call.1} parent=39 // pred_region
        %s1554 = smul.u32 16, %s24
      $region44: #{tpu_custom_call.1} parent=39 // pred_fallthru
        _
      // Predicated region
      $region45: #{tpu_custom_call.1} parent=39 // pred_check
        %p1555 = pneg %p205
      $region46: #{tpu_custom_call.1} parent=39 // pred_check_branch
        %1557 = sbr.rel (%p1555) target = $region48
      $region47: #{tpu_custom_call.1} parent=39 // pred_region
        %s1558 = smul.u32 16, %s24
      $region48: #{tpu_custom_call.1} parent=39 // pred_fallthru
        _
      // Predicated region
      $region49: #{tpu_custom_call.1} parent=39 // pred_check
        %p1559 = pneg %p233
      $region50: #{tpu_custom_call.1} parent=39 // pred_check_branch
        %1561 = sbr.rel (%p1559) target = $region52
      $region51: #{tpu_custom_call.1} parent=39 // pred_region
        %s1562 = smul.u32 16, %s24
      $region52: #{tpu_custom_call.1} parent=39 // pred_fallthru
        _
    $region40: #{tpu_custom_call.1} parent=5 // pred_fallthru
      _
    %p1563 = scmp.le.s32.totalorder 2, %s14
    // Predicated region
    $region53: #{tpu_custom_call.1} parent=5 // pred_check
      %p1564 = pneg %p1563
    $region54: #{tpu_custom_call.1} parent=5 // pred_check_branch
      %1566 = sbr.rel (%p1564) target = $region56
    $region55: #{tpu_custom_call.1} parent=5 // pred_region
      %s1567 = ssub.s32 %s14, 2
      // Predicated region
      $region57: #{tpu_custom_call.1} parent=55 // pred_check
        %p1568 = pneg %p183
      $region58: #{tpu_custom_call.1} parent=55 // pred_check_branch
        %1570 = sbr.rel (%p1568) target = $region60
      $region59: #{tpu_custom_call.1} parent=55 // pred_region
        %s1571 = smul.u32 16, %s26
        %p1572 = scmp.lt.s32.totalorder %s25, 1
        %s1573 = scalar_select %p1572, %s25, 1
        %p1574 = scmp.lt.s32.totalorder %s1571, 15
        %s1575 = scalar_select %p1574, %s1571, 15
        %s1576 = smul.addr %s1573, 64
        %s1577 = sadd.s32 %s1575, %s1576
        %s1578 = smul.addr %s1577, 4
        %s1579 = scalar_lea.vmem %s5, %s1578
      $region60: #{tpu_custom_call.1} parent=55 // pred_fallthru
        _
      // Predicated region
      $region61: #{tpu_custom_call.1} parent=55 // pred_check
        %p1580 = pneg %p211
      $region62: #{tpu_custom_call.1} parent=55 // pred_check_branch
        %1582 = sbr.rel (%p1580) target = $region64
      $region63: #{tpu_custom_call.1} parent=55 // pred_region
        %s1583 = smul.u32 16, %s26
        %p1584 = scmp.lt.s32.totalorder %s25, 1
        %s1585 = scalar_select %p1584, %s25, 1
        %p1586 = scmp.lt.s32.totalorder %s1583, 15
        %s1587 = scalar_select %p1586, %s1583, 15
        %s1588 = smul.addr %s1585, 64
        %s1589 = sadd.s32 %s1587, %s1588
        %s1590 = smul.addr %s1589, 4
        %s1591 = scalar_lea.vmem %s6, %s1590
      $region64: #{tpu_custom_call.1} parent=55 // pred_fallthru
        _
      // Predicated region
      $region65: #{tpu_custom_call.1} parent=55 // pred_check
        %p1592 = pneg %p239
      $region66: #{tpu_custom_call.1} parent=55 // pred_check_branch
        %1594 = sbr.rel (%p1592) target = $region68
      $region67: #{tpu_custom_call.1} parent=55 // pred_region
        %s1595 = smul.u32 16, %s26
        %p1596 = scmp.lt.s32.totalorder %s25, 1
        %s1597 = scalar_select %p1596, %s25, 1
        %p1598 = scmp.lt.s32.totalorder %s1595, 15
        %s1599 = scalar_select %p1598, %s1595, 15
        %s1600 = smul.addr %s1597, 64
        %s1601 = sadd.s32 %s1599, %s1600
        %s1602 = smul.addr %s1601, 4
        %s1603 = scalar_lea.vmem %s7, %s1602
      $region68: #{tpu_custom_call.1} parent=55 // pred_fallthru
        _
    $region56: #{tpu_custom_call.1} parent=5 // pred_fallthru
      _
  $region6: #{tpu_custom_call.1} parent=0 // loop_footer
    %s18 = sadd.s32 1, %s14
  $region7: #{tpu_custom_call.1} parent=0 // loop_footer_branch
    %13 = sbr.rel target = $region3
  $region8: #{tpu_custom_call.1} parent=0 // loop_exit
    _

</llo_original>
